<compile_context>
chip_gen: v5e
topology: v5e:2x2
jax: 0.10.0
libtpu: 0.0.40
codegen_flags: <defaults>
</compile_context>

<pallas_src>
import functools

import jax
import jax.numpy as jnp
from jax.experimental import pallas as pl
from jax.experimental.pallas import tpu as pltpu

# ----------------------------- config ---------------------------------------
VOCAB = 64
MAX_POS = 16
HIDDEN = 32
NUM_HEADS = 4
HEAD_DIM = HIDDEN // NUM_HEADS
FFN = 64
NUM_LAYERS = 2
DROPOUT_RATE = 0.1   # nn.Dropout(p) — identity in eval mode (see TODO in kernel)
OUT_PAD = 128        # lane-dense width for padded QKV / FFN1 / head outputs

# ---- packed-slab row offsets (all section starts are multiples of 8) --------
W32_OFF_WEMB = 0
W32_OFF_POS = VOCAB                                   # 64
W32_LAYER_BASE = VOCAB + MAX_POS                      # 80
W32_LAYER_STRIDE = HIDDEN + OUT_PAD                   # wo (32 rows) + w2_pad (128 rows)
W32_OFF_POOLW = W32_LAYER_BASE + NUM_LAYERS * W32_LAYER_STRIDE   # 400
W32_ROWS = W32_OFF_POOLW + HIDDEN                     # 432

W128_LAYER_STRIDE = 2 * HIDDEN                        # wqkv_pad (32) + w1_pad (32)
W128_OFF_HEADW = NUM_LAYERS * W128_LAYER_STRIDE       # 128
W128_ROWS = W128_OFF_HEADW + HIDDEN                   # 160

VEC_EMB_G, VEC_EMB_B = 0, 1
VEC_LAYER_BASE = 2
VEC_LAYER_STRIDE = 8                                  # bqkv, bo, ln1g, ln1b, b1, b2, ln2g, ln2b
VEC_TAIL_BASE = VEC_LAYER_BASE + NUM_LAYERS * VEC_LAYER_STRIDE   # pool_b, hln_g, hln_b, head_b
VEC_ROWS = VEC_TAIL_BASE + 4                          # 22


def _ln(x, g, b, eps):
    """LayerNorm over the last axis (f32)."""
    mu = jnp.mean(x, axis=-1, keepdims=True)
    var = jnp.mean((x - mu) ** 2, axis=-1, keepdims=True)
    return (x - mu) * jax.lax.rsqrt(var + eps) * g + b


# --------------------------- fused Pallas kernel ------------------------------
def fused_dpr_kernel(ids_ref, mask_ref, w32_ref, w128_ref, vec_ref, o_ref):
    B = mask_ref.shape[0]
    S = mask_ref.shape[2]
    H, NH, hd = HIDDEN, NUM_HEADS, HEAD_DIM
    BS = B * S
    scale = 1.0 / float(hd) ** 0.5

    def vec(i, w=H):
        return vec_ref[i:i + 1, :w]                               # (1, w)

    # ---- embeddings: one-hot token gather as a single MXU matmul ------------
    ids = ids_ref[...]                                            # (BS, 1) int32
    iota = jax.lax.broadcasted_iota(jnp.int32, (BS, VOCAB), 1)
    onehot = (ids == iota).astype(jnp.float32)                    # (BS, VOCAB)
    wemb = w32_ref[W32_OFF_WEMB:W32_OFF_WEMB + VOCAB, :]          # (VOCAB, H)
    emb = jnp.dot(onehot, wemb, preferred_element_type=jnp.float32)       # (BS, H)
    pos_type = w32_ref[W32_OFF_POS:W32_OFF_POS + S, :]            # (S, H) pos+type pre-added
    emb3 = emb.reshape(B, S, H) + pos_type[None]
    x2 = _ln(emb3, vec(VEC_EMB_G), vec(VEC_EMB_B), 1e-12).reshape(BS, H)

    # ---- attention-mask bias, built once (hoisted out of the layer loop) ----
    maskf = mask_ref[...].astype(jnp.float32)                     # (B, 1, S)
    bias = (1.0 - maskf) * (-1e9)
    bias_rep = jnp.broadcast_to(bias[None], (NH, B, 1, S)).reshape(NH * B, 1, S)

    # ---- transformer encoder layers (straight-line, all weights in VMEM) ----
    for l in range(NUM_LAYERS):
        wb128 = l * W128_LAYER_STRIDE
        wqkv = w128_ref[wb128:wb128 + H, :]                       # (H, 128): Q|K|V|0 cols
        w1 = w128_ref[wb128 + H:wb128 + 2 * H, :]                 # (H, 128): FFN1 zero-padded
        wb32 = W32_LAYER_BASE + l * W32_LAYER_STRIDE
        wo = w32_ref[wb32:wb32 + H, :]                            # (H, H)
        w2 = w32_ref[wb32 + H:wb32 + H + OUT_PAD, :]              # (128, H): zero rows 64..127
        vb = VEC_LAYER_BASE + l * VEC_LAYER_STRIDE

        # Fused QKV: ONE lane-dense matmul for all heads.
        qkv = jnp.dot(x2, wqkv, preferred_element_type=jnp.float32) + vec(vb + 0, OUT_PAD)
        qkv3 = qkv.reshape(B, S, OUT_PAD)                         # (B, S, 128)

        # Split heads via static 8-lane slices; batch axis = (head, batch).
        q = jnp.stack([qkv3[:, :, n * hd:(n + 1) * hd] for n in range(NH)],
                      axis=0).reshape(NH * B, S, hd)
        k = jnp.stack([qkv3[:, :, H + n * hd:H + (n + 1) * hd] for n in range(NH)],
                      axis=0).reshape(NH * B, S, hd)
        v = jnp.stack([qkv3[:, :, 2 * H + n * hd:2 * H + (n + 1) * hd] for n in range(NH)],
                      axis=0).reshape(NH * B, S, hd)

        scores = jnp.einsum('nqd,nkd->nqk', q, k,
                            preferred_element_type=jnp.float32) * scale + bias_rep
        m = jnp.max(scores, axis=-1, keepdims=True)
        e = jnp.exp(scores - m)
        probs = e * pl.reciprocal(jnp.sum(e, axis=-1, keepdims=True), approx=True)
        ctx = jnp.einsum('nqk,nkd->nqd', probs, v,
                         preferred_element_type=jnp.float32)      # (NH*B, S, hd)

        # Concat heads back along lanes -> ONE output-projection matmul.
        ctx4 = ctx.reshape(NH, B, S, hd)
        ctx2 = jnp.concatenate([ctx4[n] for n in range(NH)], axis=-1).reshape(BS, H)
        attn = jnp.dot(ctx2, wo, preferred_element_type=jnp.float32) + vec(vb + 1)

        h1 = _ln(x2 + attn, vec(vb + 2), vec(vb + 3), 1e-12)

        ff = jnp.dot(h1, w1, preferred_element_type=jnp.float32) + vec(vb + 4, OUT_PAD)
        # TODO(synk): HF BERT defaults to the exact erf GELU; tanh approximation used here.
        ff = jax.nn.gelu(ff, approximate=True)                    # (BS, 128) lane-dense
        ff = jnp.dot(ff, w2, preferred_element_type=jnp.float32) + vec(vb + 5)
        x2 = _ln(h1 + ff, vec(vb + 6), vec(vb + 7), 1e-12)

    # ---- BERT pooler + the module's head: Linear(Dropout(LayerNorm(pooled))) ----
    pool_w = w32_ref[W32_OFF_POOLW:W32_OFF_POOLW + H, :]          # (H, H)
    head_w = w128_ref[W128_OFF_HEADW:W128_OFF_HEADW + H, :]       # (H, 128) zero-padded
    tb = VEC_TAIL_BASE
    cls = x2.reshape(B, S, H)[:, 0, :]                            # (B, H)
    pooled = jnp.tanh(jnp.dot(cls, pool_w,
                              preferred_element_type=jnp.float32) + vec(tb + 0))
    z = _ln(pooled, vec(tb + 1), vec(tb + 2), 1e-5)               # nn.LayerNorm default eps
    # TODO(synk): nn.Dropout is identity in eval mode; training-mode dropout would use
    #             pltpu.prng_seed / pltpu.prng_random_bits here.
    out = jnp.dot(z, head_w, preferred_element_type=jnp.float32) + vec(tb + 3, OUT_PAD)
    o_ref[...] = out                                              # (B, 128) lane-dense store


# ----------------------- parameter initialization ----------------------------
def init_params(key):
    keys = iter(jax.random.split(key, 64))

    def nrm(shape, s=0.02):
        return s * jax.random.normal(next(keys), shape, jnp.float32)

    p = {
        'word_emb': nrm((VOCAB, HIDDEN)),
        'pos_emb': nrm((MAX_POS, HIDDEN)),
        'type_emb': nrm((2, HIDDEN)),
        'emb_ln_g': 1.0 + nrm((1, HIDDEN), 0.05),
        'emb_ln_b': nrm((1, HIDDEN)),
        'pool_w': nrm((HIDDEN, HIDDEN)),
        'pool_b': nrm((1, HIDDEN)),
        'head_ln_g': 1.0 + nrm((1, HIDDEN), 0.05),
        'head_ln_b': nrm((1, HIDDEN)),
        'head_w': nrm((HIDDEN, HIDDEN)),
        'head_b': nrm((1, HIDDEN)),
        'layers': [],
    }
    for _ in range(NUM_LAYERS):
        p['layers'].append({
            'wq': nrm((HIDDEN, HIDDEN)), 'bq': nrm((1, HIDDEN)),
            'wk': nrm((HIDDEN, HIDDEN)), 'bk': nrm((1, HIDDEN)),
            'wv': nrm((HIDDEN, HIDDEN)), 'bv': nrm((1, HIDDEN)),
            'wo': nrm((HIDDEN, HIDDEN)), 'bo': nrm((1, HIDDEN)),
            'ln1_g': 1.0 + nrm((1, HIDDEN), 0.05), 'ln1_b': nrm((1, HIDDEN)),
            'w1': nrm((HIDDEN, FFN)), 'b1': nrm((1, FFN)),
            'w2': nrm((FFN, HIDDEN)), 'b2': nrm((1, HIDDEN)),
            'ln2_g': 1.0 + nrm((1, HIDDEN), 0.05), 'ln2_b': nrm((1, HIDDEN)),
        })
    return p


def pack_params(p):
    """Pack all parameters into 3 VMEM slabs (few DMA descriptors, aligned sections)."""
    def padc(w, width=OUT_PAD):                   # zero-pad columns to `width`
        return jnp.pad(w, ((0, 0), (0, width - w.shape[1])))

    def vrow(v):                                  # (1, C) -> (1, 128)
        return jnp.pad(v.reshape(1, -1), ((0, 0), (0, OUT_PAD - v.size)))

    # (160, 128) slab: per-layer fused W_qkv (Q|K|V|0) and zero-padded W1, then head_w.
    rows128 = []
    for lp in p['layers']:
        rows128.append(padc(jnp.concatenate([lp['wq'], lp['wk'], lp['wv']], axis=1)))
        rows128.append(padc(lp['w1']))
    rows128.append(padc(p['head_w']))
    w128 = jnp.concatenate(rows128, axis=0)
    assert w128.shape == (W128_ROWS, OUT_PAD)

    # (432, 32) slab: word_emb, (pos+type), per-layer [wo, zero-row-padded w2], pool_w.
    rows32 = [p['word_emb'], p['pos_emb'] + p['type_emb'][0:1]]
    for lp in p['layers']:
        rows32.append(lp['wo'])
        rows32.append(jnp.pad(lp['w2'], ((0, OUT_PAD - FFN), (0, 0))))
    rows32.append(p['pool_w'])
    w32 = jnp.concatenate(rows32, axis=0)
    assert w32.shape == (W32_ROWS, HIDDEN)

    # (22, 128) slab: every bias / gamma / beta, zero-padded to 128 lanes.
    vrows = [vrow(p['emb_ln_g']), vrow(p['emb_ln_b'])]
    for lp in p['layers']:
        bqkv = jnp.concatenate([lp['bq'], lp['bk'], lp['bv']], axis=1)
        vrows += [vrow(bqkv), vrow(lp['bo']), vrow(lp['ln1_g']), vrow(lp['ln1_b']),
                  vrow(lp['b1']), vrow(lp['b2']), vrow(lp['ln2_g']), vrow(lp['ln2_b'])]
    vrows += [vrow(p['pool_b']), vrow(p['head_ln_g']), vrow(p['head_ln_b']), vrow(p['head_b'])]
    vecs = jnp.concatenate(vrows, axis=0)
    assert vecs.shape == (VEC_ROWS, OUT_PAD)

    return {'w32': w32, 'w128': w128, 'vec': vecs}


# ----------------------------- forward pass -----------------------------------
def dpr_forward(packed, input_ids, attention_mask):
    """Fused forward: one pallas_call, 5 operands, all params + activations in VMEM."""
    B, S = input_ids.shape
    ids2 = input_ids.reshape(B * S, 1).astype(jnp.int32)
    mask3 = attention_mask.reshape(B, 1, S).astype(jnp.int32)

    vmem = pl.BlockSpec(memory_space=pltpu.MemorySpace.VMEM)
    # TODO(synk): for real DPR dims (H=768, 12 layers, S>=128) the all-weights-in-VMEM
    #             scheme exceeds v7x's 64 MiB — switch to bf16 weights streamed via a
    #             BlockSpec grid over layers/K, set vmem_limit_bytes explicitly, and add
    #             a batch grid axis with dimension_semantics=("parallel",) so both v7x
    #             TensorCores are used.
    out = pl.pallas_call(
        fused_dpr_kernel,
        out_shape=jax.ShapeDtypeStruct((B, OUT_PAD), jnp.float32),
        in_specs=[vmem] * 5,
        out_specs=vmem,
    )(ids2, mask3, packed['w32'], packed['w128'], packed['vec'])
    return out[:, :HIDDEN]


# ----------------------- pure-JAX reference (for checking) --------------------
def dpr_forward_ref(params, input_ids, attention_mask):
    B, S = input_ids.shape
    NH, hd = NUM_HEADS, HEAD_DIM
    x = (params['word_emb'][input_ids]
         + params['pos_emb'][None, :S, :]
         + params['type_emb'][None, 0:1, :])
    x = _ln(x, params['emb_ln_g'], params['emb_ln_b'], 1e-12)
    bias = (1.0 - attention_mask.astype(jnp.float32))[:, None, None, :] * (-1e9)
    for lp in params['layers']:
        q = (x @ lp['wq'] + lp['bq']).reshape(B, S, NH, hd).transpose(0, 2, 1, 3)
        k = (x @ lp['wk'] + lp['bk']).reshape(B, S, NH, hd).transpose(0, 2, 1, 3)
        v = (x @ lp['wv'] + lp['bv']).reshape(B, S, NH, hd).transpose(0, 2, 1, 3)
        s = jnp.einsum('bnqd,bnkd->bnqk', q, k) / (hd ** 0.5) + bias
        probs = jax.nn.softmax(s, axis=-1)
        ctx = jnp.einsum('bnqk,bnkd->bnqd', probs, v)
        ctx = ctx.transpose(0, 2, 1, 3).reshape(B, S, HIDDEN)
        h1 = _ln(x + ctx @ lp['wo'] + lp['bo'], lp['ln1_g'], lp['ln1_b'], 1e-12)
        ff = jax.nn.gelu(h1 @ lp['w1'] + lp['b1'], approximate=True) @ lp['w2'] + lp['b2']
        x = _ln(h1 + ff, lp['ln2_g'], lp['ln2_b'], 1e-12)
    pooled = jnp.tanh(x[:, 0, :] @ params['pool_w'] + params['pool_b'])
    z = _ln(pooled, params['head_ln_g'], params['head_ln_b'], 1e-5)
    return z @ params['head_w'] + params['head_b']


# --------------------------------- main ---------------------------------------
if __name__ == "__main__":
    key = jax.random.PRNGKey(0)
    pkey, ikey = jax.random.split(key)
    params = init_params(pkey)
    packed = pack_params(params)

    B, S = 2, 8
    input_ids = jax.random.randint(ikey, (B, S), 0, VOCAB, dtype=jnp.int32)
    attention_mask = jnp.array([[1, 1, 1, 1, 1, 1, 1, 1],
                                [1, 1, 1, 1, 1, 1, 0, 0]], dtype=jnp.int32)

    fwd = jax.jit(functools.partial(dpr_forward, packed))
    out = fwd(input_ids, attention_mask)
    jax.block_until_ready(out)

    ref = dpr_forward_ref(params, input_ids, attention_mask)
    assert out.shape == (B, HIDDEN) and out.dtype == jnp.float32
    assert bool(jnp.all(jnp.isfinite(out)))
    assert bool(jnp.allclose(out, ref, atol=2e-2, rtol=2e-2)), (
        f"max abs diff {float(jnp.max(jnp.abs(out - ref)))}")
    print("KERNEL_OK")
</pallas_src>

<mosaic_0001>
module attributes {stable_mosaic.version = 11 : i64} {
  func.func @fused_dpr_kernel(%arg0: memref<16x1xi32, #tpu.memory_space<vmem>>, %arg1: memref<2x1x8xi32, #tpu.memory_space<vmem>>, %arg2: memref<432x32xf32, #tpu.memory_space<vmem>>, %arg3: memref<160x128xf32, #tpu.memory_space<vmem>>, %arg4: memref<22x128xf32, #tpu.memory_space<vmem>>, %arg5: memref<2x128xf32, #tpu.memory_space<vmem>>) attributes {dimension_semantics = [], scalar_prefetch = 0 : i64, scratch_operands = 0 : i64, tpu.core_type = #tpu.core_type<tc>} {
    %c0 = arith.constant 0 : index
    %c0_0 = arith.constant 0 : index
    %0 = vector.load %arg0[%c0, %c0_0] : memref<16x1xi32, #tpu.memory_space<vmem>>, vector<16x1xi32>
    %1 = tpu.iota {dimensions = array<i32: 1>} : vector<16x64xi32>
    %2 = vector.broadcast %0 : vector<16x1xi32> to vector<16x64xi32>
    %3 = arith.cmpi eq, %2, %1 : vector<16x64xi32>
    %4 = arith.extui %3 : vector<16x64xi1> to vector<16x64xi32>
    %5 = arith.sitofp %4 : vector<16x64xi32> to vector<16x64xf32>
    %c0_1 = arith.constant 0 : index
    %c0_2 = arith.constant 0 : index
    %6 = vector.load %arg2[%c0_1, %c0_2] : memref<432x32xf32, #tpu.memory_space<vmem>>, vector<64x32xf32>
    %cst = arith.constant dense<0.000000e+00> : vector<16x32xf32>
    %7 = tpu.matmul %5, %6, %cst {dimension_numbers = #tpu.dot_dimension_numbers<[1], [0], [0], [1], [0, 0, 1, 1], [], []>} : vector<16x64xf32>, vector<64x32xf32>, vector<16x32xf32> -> vector<16x32xf32>
    %c64 = arith.constant 64 : index
    %c0_3 = arith.constant 0 : index
    %8 = vector.load %arg2[%c64, %c0_3] : memref<432x32xf32, #tpu.memory_space<vmem>>, vector<8x32xf32>
    %9 = vector.shape_cast %7 : vector<16x32xf32> to vector<2x8x32xf32>
    %10 = vector.shape_cast %8 : vector<8x32xf32> to vector<1x8x32xf32>
    %11 = vector.broadcast %10 : vector<1x8x32xf32> to vector<2x8x32xf32>
    %12 = arith.addf %9, %11 : vector<2x8x32xf32>
    %c0_4 = arith.constant 0 : index
    %c0_5 = arith.constant 0 : index
    %13 = vector.load %arg4[%c0_4, %c0_5] : memref<22x128xf32, #tpu.memory_space<vmem>>, vector<1x32xf32>
    %c1 = arith.constant 1 : index
    %c0_6 = arith.constant 0 : index
    %14 = vector.load %arg4[%c1, %c0_6] : memref<22x128xf32, #tpu.memory_space<vmem>>, vector<1x32xf32>
    %cst_7 = arith.constant dense<0.000000e+00> : vector<2x8xf32>
    %15 = vector.multi_reduction <add>, %12, %cst_7 [2] : vector<2x8x32xf32> to vector<2x8xf32>
    %16 = vector.shape_cast %15 : vector<2x8xf32> to vector<2x8x1xf32>
    %cst_8 = arith.constant 3.200000e+01 : f32
    %17 = vector.broadcast %cst_8 : f32 to vector<2x8x1xf32>
    %18 = arith.divf %16, %17 : vector<2x8x1xf32>
    %19 = vector.broadcast %18 : vector<2x8x1xf32> to vector<2x8x32xf32>
    %20 = arith.subf %12, %19 : vector<2x8x32xf32>
    %21 = arith.mulf %20, %20 : vector<2x8x32xf32>
    %cst_9 = arith.constant dense<0.000000e+00> : vector<2x8xf32>
    %22 = vector.multi_reduction <add>, %21, %cst_9 [2] : vector<2x8x32xf32> to vector<2x8xf32>
    %23 = vector.shape_cast %22 : vector<2x8xf32> to vector<2x8x1xf32>
    %cst_10 = arith.constant 3.200000e+01 : f32
    %24 = vector.broadcast %cst_10 : f32 to vector<2x8x1xf32>
    %25 = arith.divf %23, %24 : vector<2x8x1xf32>
    %26 = vector.broadcast %18 : vector<2x8x1xf32> to vector<2x8x32xf32>
    %27 = arith.subf %12, %26 : vector<2x8x32xf32>
    %cst_11 = arith.constant 9.99999996E-13 : f32
    %28 = vector.broadcast %cst_11 : f32 to vector<2x8x1xf32>
    %29 = arith.addf %25, %28 : vector<2x8x1xf32>
    %30 = math.rsqrt %29 : vector<2x8x1xf32>
    %31 = vector.broadcast %30 : vector<2x8x1xf32> to vector<2x8x32xf32>
    %32 = arith.mulf %27, %31 : vector<2x8x32xf32>
    %33 = vector.shape_cast %13 : vector<1x32xf32> to vector<1x1x32xf32>
    %34 = vector.broadcast %33 : vector<1x1x32xf32> to vector<2x8x32xf32>
    %35 = arith.mulf %32, %34 : vector<2x8x32xf32>
    %36 = vector.shape_cast %14 : vector<1x32xf32> to vector<1x1x32xf32>
    %37 = vector.broadcast %36 : vector<1x1x32xf32> to vector<2x8x32xf32>
    %38 = arith.addf %35, %37 : vector<2x8x32xf32>
    %39 = vector.shape_cast %38 : vector<2x8x32xf32> to vector<16x32xf32>
    %c0_12 = arith.constant 0 : index
    %c0_13 = arith.constant 0 : index
    %c0_14 = arith.constant 0 : index
    %40 = vector.load %arg1[%c0_12, %c0_13, %c0_14] : memref<2x1x8xi32, #tpu.memory_space<vmem>>, vector<2x1x8xi32>
    %41 = arith.sitofp %40 : vector<2x1x8xi32> to vector<2x1x8xf32>
    %cst_15 = arith.constant 1.000000e+00 : f32
    %42 = vector.broadcast %cst_15 : f32 to vector<2x1x8xf32>
    %43 = arith.subf %42, %41 : vector<2x1x8xf32>
    %cst_16 = arith.constant -1.000000e+09 : f32
    %44 = vector.broadcast %cst_16 : f32 to vector<2x1x8xf32>
    %45 = arith.mulf %43, %44 : vector<2x1x8xf32>
    %46 = vector.shape_cast %45 : vector<2x1x8xf32> to vector<1x2x1x8xf32>
    %47 = vector.shape_cast %46 : vector<1x2x1x8xf32> to vector<1x2x1x8xf32>
    %48 = vector.broadcast %47 : vector<1x2x1x8xf32> to vector<4x2x1x8xf32>
    %49 = vector.shape_cast %48 : vector<4x2x1x8xf32> to vector<8x1x8xf32>
    %c0_17 = arith.constant 0 : index
    %c0_18 = arith.constant 0 : index
    %50 = vector.load %arg3[%c0_17, %c0_18] : memref<160x128xf32, #tpu.memory_space<vmem>>, vector<32x128xf32>
    %c32 = arith.constant 32 : index
    %c0_19 = arith.constant 0 : index
    %51 = vector.load %arg3[%c32, %c0_19] : memref<160x128xf32, #tpu.memory_space<vmem>>, vector<32x128xf32>
    %c80 = arith.constant 80 : index
    %c0_20 = arith.constant 0 : index
    %52 = vector.load %arg2[%c80, %c0_20] : memref<432x32xf32, #tpu.memory_space<vmem>>, vector<32x32xf32>
    %c112 = arith.constant 112 : index
    %c0_21 = arith.constant 0 : index
    %53 = vector.load %arg2[%c112, %c0_21] : memref<432x32xf32, #tpu.memory_space<vmem>>, vector<128x32xf32>
    %cst_22 = arith.constant dense<0.000000e+00> : vector<16x128xf32>
    %54 = tpu.matmul %39, %50, %cst_22 {dimension_numbers = #tpu.dot_dimension_numbers<[1], [0], [0], [1], [0, 0, 1, 1], [], []>} : vector<16x32xf32>, vector<32x128xf32>, vector<16x128xf32> -> vector<16x128xf32>
    %c2 = arith.constant 2 : index
    %c0_23 = arith.constant 0 : index
    %55 = vector.load %arg4[%c2, %c0_23] : memref<22x128xf32, #tpu.memory_space<vmem>>, vector<1x128xf32>
    %56 = vector.broadcast %55 : vector<1x128xf32> to vector<16x128xf32>
    %57 = arith.addf %54, %56 : vector<16x128xf32>
    %58 = vector.shape_cast %57 : vector<16x128xf32> to vector<2x8x128xf32>
    %59 = vector.extract_strided_slice %58 {offsets = [0, 0, 0], sizes = [2, 8, 8], strides = [1, 1, 1]} : vector<2x8x128xf32> to vector<2x8x8xf32>
    %60 = vector.extract_strided_slice %58 {offsets = [0, 0, 8], sizes = [2, 8, 8], strides = [1, 1, 1]} : vector<2x8x128xf32> to vector<2x8x8xf32>
    %61 = vector.extract_strided_slice %58 {offsets = [0, 0, 16], sizes = [2, 8, 8], strides = [1, 1, 1]} : vector<2x8x128xf32> to vector<2x8x8xf32>
    %62 = vector.extract_strided_slice %58 {offsets = [0, 0, 24], sizes = [2, 8, 8], strides = [1, 1, 1]} : vector<2x8x128xf32> to vector<2x8x8xf32>
    %63 = vector.shape_cast %59 : vector<2x8x8xf32> to vector<1x2x8x8xf32>
    %64 = vector.shape_cast %60 : vector<2x8x8xf32> to vector<1x2x8x8xf32>
    %65 = vector.shape_cast %61 : vector<2x8x8xf32> to vector<1x2x8x8xf32>
    %66 = vector.shape_cast %62 : vector<2x8x8xf32> to vector<1x2x8x8xf32>
    %67 = tpu.concatenate %63, %64, %65, %66 in 0 : vector<1x2x8x8xf32>, vector<1x2x8x8xf32>, vector<1x2x8x8xf32>, vector<1x2x8x8xf32> -> vector<4x2x8x8xf32>
    %68 = vector.shape_cast %67 : vector<4x2x8x8xf32> to vector<8x8x8xf32>
    %69 = vector.extract_strided_slice %58 {offsets = [0, 0, 32], sizes = [2, 8, 8], strides = [1, 1, 1]} : vector<2x8x128xf32> to vector<2x8x8xf32>
    %70 = vector.extract_strided_slice %58 {offsets = [0, 0, 40], sizes = [2, 8, 8], strides = [1, 1, 1]} : vector<2x8x128xf32> to vector<2x8x8xf32>
    %71 = vector.extract_strided_slice %58 {offsets = [0, 0, 48], sizes = [2, 8, 8], strides = [1, 1, 1]} : vector<2x8x128xf32> to vector<2x8x8xf32>
    %72 = vector.extract_strided_slice %58 {offsets = [0, 0, 56], sizes = [2, 8, 8], strides = [1, 1, 1]} : vector<2x8x128xf32> to vector<2x8x8xf32>
    %73 = vector.shape_cast %69 : vector<2x8x8xf32> to vector<1x2x8x8xf32>
    %74 = vector.shape_cast %70 : vector<2x8x8xf32> to vector<1x2x8x8xf32>
    %75 = vector.shape_cast %71 : vector<2x8x8xf32> to vector<1x2x8x8xf32>
    %76 = vector.shape_cast %72 : vector<2x8x8xf32> to vector<1x2x8x8xf32>
    %77 = tpu.concatenate %73, %74, %75, %76 in 0 : vector<1x2x8x8xf32>, vector<1x2x8x8xf32>, vector<1x2x8x8xf32>, vector<1x2x8x8xf32> -> vector<4x2x8x8xf32>
    %78 = vector.shape_cast %77 : vector<4x2x8x8xf32> to vector<8x8x8xf32>
    %79 = vector.extract_strided_slice %58 {offsets = [0, 0, 64], sizes = [2, 8, 8], strides = [1, 1, 1]} : vector<2x8x128xf32> to vector<2x8x8xf32>
    %80 = vector.extract_strided_slice %58 {offsets = [0, 0, 72], sizes = [2, 8, 8], strides = [1, 1, 1]} : vector<2x8x128xf32> to vector<2x8x8xf32>
    %81 = vector.extract_strided_slice %58 {offsets = [0, 0, 80], sizes = [2, 8, 8], strides = [1, 1, 1]} : vector<2x8x128xf32> to vector<2x8x8xf32>
    %82 = vector.extract_strided_slice %58 {offsets = [0, 0, 88], sizes = [2, 8, 8], strides = [1, 1, 1]} : vector<2x8x128xf32> to vector<2x8x8xf32>
    %83 = vector.shape_cast %79 : vector<2x8x8xf32> to vector<1x2x8x8xf32>
    %84 = vector.shape_cast %80 : vector<2x8x8xf32> to vector<1x2x8x8xf32>
    %85 = vector.shape_cast %81 : vector<2x8x8xf32> to vector<1x2x8x8xf32>
    %86 = vector.shape_cast %82 : vector<2x8x8xf32> to vector<1x2x8x8xf32>
    %87 = tpu.concatenate %83, %84, %85, %86 in 0 : vector<1x2x8x8xf32>, vector<1x2x8x8xf32>, vector<1x2x8x8xf32>, vector<1x2x8x8xf32> -> vector<4x2x8x8xf32>
    %88 = vector.shape_cast %87 : vector<4x2x8x8xf32> to vector<8x8x8xf32>
    "tpu.trace_start"() <{level = 10 : i32, message = "nqd,nkd->nqk"}> : () -> ()
    %cst_24 = arith.constant dense<0.000000e+00> : vector<8x8x8xf32>
    %89 = tpu.matmul %68, %78, %cst_24 {dimension_numbers = #tpu.dot_dimension_numbers<[2], [2], [1], [1], [0, 0, 0, 1, 1, 1], [0], [0]>} : vector<8x8x8xf32>, vector<8x8x8xf32>, vector<8x8x8xf32> -> vector<8x8x8xf32>
    "tpu.trace_stop"() : () -> ()
    %cst_25 = arith.constant 0.353553385 : f32
    %90 = vector.broadcast %cst_25 : f32 to vector<8x8x8xf32>
    %91 = arith.mulf %89, %90 : vector<8x8x8xf32>
    %92 = vector.broadcast %49 : vector<8x1x8xf32> to vector<8x8x8xf32>
    %93 = arith.addf %91, %92 : vector<8x8x8xf32>
    %cst_26 = arith.constant dense<0xFF800000> : vector<8x8xf32>
    %94 = vector.multi_reduction <maximumf>, %93, %cst_26 [2] : vector<8x8x8xf32> to vector<8x8xf32>
    %95 = vector.shape_cast %94 : vector<8x8xf32> to vector<8x8x1xf32>
    %96 = vector.broadcast %95 : vector<8x8x1xf32> to vector<8x8x8xf32>
    %97 = arith.subf %93, %96 : vector<8x8x8xf32>
    %98 = math.exp %97 : vector<8x8x8xf32>
    %cst_27 = arith.constant dense<0.000000e+00> : vector<8x8xf32>
    %99 = vector.multi_reduction <add>, %98, %cst_27 [2] : vector<8x8x8xf32> to vector<8x8xf32>
    %100 = vector.shape_cast %99 : vector<8x8xf32> to vector<8x8x1xf32>
    %101 = tpu.reciprocal %100 {approx = true} : vector<8x8x1xf32> -> vector<8x8x1xf32>
    %102 = vector.broadcast %101 : vector<8x8x1xf32> to vector<8x8x8xf32>
    %103 = arith.mulf %98, %102 : vector<8x8x8xf32>
    "tpu.trace_start"() <{level = 10 : i32, message = "nqk,nkd->nqd"}> : () -> ()
    %cst_28 = arith.constant dense<0.000000e+00> : vector<8x8x8xf32>
    %104 = tpu.matmul %103, %88, %cst_28 {dimension_numbers = #tpu.dot_dimension_numbers<[2], [1], [1], [2], [0, 0, 0, 1, 1, 2], [0], [0]>} : vector<8x8x8xf32>, vector<8x8x8xf32>, vector<8x8x8xf32> -> vector<8x8x8xf32>
    "tpu.trace_stop"() : () -> ()
    %105 = vector.shape_cast %104 : vector<8x8x8xf32> to vector<4x2x8x8xf32>
    %106 = vector.extract_strided_slice %105 {offsets = [0, 0, 0, 0], sizes = [1, 2, 8, 8], strides = [1, 1, 1, 1]} : vector<4x2x8x8xf32> to vector<1x2x8x8xf32>
    %107 = vector.shape_cast %106 : vector<1x2x8x8xf32> to vector<2x8x8xf32>
    %108 = vector.extract_strided_slice %105 {offsets = [1, 0, 0, 0], sizes = [1, 2, 8, 8], strides = [1, 1, 1, 1]} : vector<4x2x8x8xf32> to vector<1x2x8x8xf32>
    %109 = vector.shape_cast %108 : vector<1x2x8x8xf32> to vector<2x8x8xf32>
    %110 = vector.extract_strided_slice %105 {offsets = [2, 0, 0, 0], sizes = [1, 2, 8, 8], strides = [1, 1, 1, 1]} : vector<4x2x8x8xf32> to vector<1x2x8x8xf32>
    %111 = vector.shape_cast %110 : vector<1x2x8x8xf32> to vector<2x8x8xf32>
    %112 = vector.extract_strided_slice %105 {offsets = [3, 0, 0, 0], sizes = [1, 2, 8, 8], strides = [1, 1, 1, 1]} : vector<4x2x8x8xf32> to vector<1x2x8x8xf32>
    %113 = vector.shape_cast %112 : vector<1x2x8x8xf32> to vector<2x8x8xf32>
    %114 = tpu.concatenate %107, %109, %111, %113 in 2 : vector<2x8x8xf32>, vector<2x8x8xf32>, vector<2x8x8xf32>, vector<2x8x8xf32> -> vector<2x8x32xf32>
    %115 = vector.shape_cast %114 : vector<2x8x32xf32> to vector<16x32xf32>
    %cst_29 = arith.constant dense<0.000000e+00> : vector<16x32xf32>
    %116 = tpu.matmul %115, %52, %cst_29 {dimension_numbers = #tpu.dot_dimension_numbers<[1], [0], [0], [1], [0, 0, 1, 1], [], []>} : vector<16x32xf32>, vector<32x32xf32>, vector<16x32xf32> -> vector<16x32xf32>
    %c3 = arith.constant 3 : index
    %c0_30 = arith.constant 0 : index
    %117 = vector.load %arg4[%c3, %c0_30] : memref<22x128xf32, #tpu.memory_space<vmem>>, vector<1x32xf32>
    %118 = vector.broadcast %117 : vector<1x32xf32> to vector<16x32xf32>
    %119 = arith.addf %116, %118 : vector<16x32xf32>
    %120 = arith.addf %39, %119 : vector<16x32xf32>
    %c4 = arith.constant 4 : index
    %c0_31 = arith.constant 0 : index
    %121 = vector.load %arg4[%c4, %c0_31] : memref<22x128xf32, #tpu.memory_space<vmem>>, vector<1x32xf32>
    %c5 = arith.constant 5 : index
    %c0_32 = arith.constant 0 : index
    %122 = vector.load %arg4[%c5, %c0_32] : memref<22x128xf32, #tpu.memory_space<vmem>>, vector<1x32xf32>
    %cst_33 = arith.constant dense<0.000000e+00> : vector<16xf32>
    %123 = vector.multi_reduction <add>, %120, %cst_33 [1] : vector<16x32xf32> to vector<16xf32>
    %124 = vector.shape_cast %123 : vector<16xf32> to vector<16x1xf32>
    %cst_34 = arith.constant 3.200000e+01 : f32
    %125 = vector.broadcast %cst_34 : f32 to vector<16x1xf32>
    %126 = arith.divf %124, %125 : vector<16x1xf32>
    %127 = vector.broadcast %126 : vector<16x1xf32> to vector<16x32xf32>
    %128 = arith.subf %120, %127 : vector<16x32xf32>
    %129 = arith.mulf %128, %128 : vector<16x32xf32>
    %cst_35 = arith.constant dense<0.000000e+00> : vector<16xf32>
    %130 = vector.multi_reduction <add>, %129, %cst_35 [1] : vector<16x32xf32> to vector<16xf32>
    %131 = vector.shape_cast %130 : vector<16xf32> to vector<16x1xf32>
    %cst_36 = arith.constant 3.200000e+01 : f32
    %132 = vector.broadcast %cst_36 : f32 to vector<16x1xf32>
    %133 = arith.divf %131, %132 : vector<16x1xf32>
    %134 = vector.broadcast %126 : vector<16x1xf32> to vector<16x32xf32>
    %135 = arith.subf %120, %134 : vector<16x32xf32>
    %cst_37 = arith.constant 9.99999996E-13 : f32
    %136 = vector.broadcast %cst_37 : f32 to vector<16x1xf32>
    %137 = arith.addf %133, %136 : vector<16x1xf32>
    %138 = math.rsqrt %137 : vector<16x1xf32>
    %139 = vector.broadcast %138 : vector<16x1xf32> to vector<16x32xf32>
    %140 = arith.mulf %135, %139 : vector<16x32xf32>
    %141 = vector.broadcast %121 : vector<1x32xf32> to vector<16x32xf32>
    %142 = arith.mulf %140, %141 : vector<16x32xf32>
    %143 = vector.broadcast %122 : vector<1x32xf32> to vector<16x32xf32>
    %144 = arith.addf %142, %143 : vector<16x32xf32>
    %cst_38 = arith.constant dense<0.000000e+00> : vector<16x128xf32>
    %145 = tpu.matmul %144, %51, %cst_38 {dimension_numbers = #tpu.dot_dimension_numbers<[1], [0], [0], [1], [0, 0, 1, 1], [], []>} : vector<16x32xf32>, vector<32x128xf32>, vector<16x128xf32> -> vector<16x128xf32>
    %c6 = arith.constant 6 : index
    %c0_39 = arith.constant 0 : index
    %146 = vector.load %arg4[%c6, %c0_39] : memref<22x128xf32, #tpu.memory_space<vmem>>, vector<1x128xf32>
    %147 = vector.broadcast %146 : vector<1x128xf32> to vector<16x128xf32>
    %148 = arith.addf %145, %147 : vector<16x128xf32>
    %149 = arith.mulf %148, %148 : vector<16x128xf32>
    %150 = arith.mulf %148, %149 : vector<16x128xf32>
    %cst_40 = arith.constant 4.471500e-02 : f32
    %151 = vector.broadcast %cst_40 : f32 to vector<16x128xf32>
    %152 = arith.mulf %151, %150 : vector<16x128xf32>
    %153 = arith.addf %148, %152 : vector<16x128xf32>
    %cst_41 = arith.constant 0.797884583 : f32
    %154 = vector.broadcast %cst_41 : f32 to vector<16x128xf32>
    %155 = arith.mulf %154, %153 : vector<16x128xf32>
    %156 = math.tanh %155 : vector<16x128xf32>
    %cst_42 = arith.constant 1.000000e+00 : f32
    %157 = vector.broadcast %cst_42 : f32 to vector<16x128xf32>
    %158 = arith.addf %157, %156 : vector<16x128xf32>
    %cst_43 = arith.constant 5.000000e-01 : f32
    %159 = vector.broadcast %cst_43 : f32 to vector<16x128xf32>
    %160 = arith.mulf %159, %158 : vector<16x128xf32>
    %161 = arith.mulf %148, %160 : vector<16x128xf32>
    %cst_44 = arith.constant dense<0.000000e+00> : vector<16x32xf32>
    %162 = tpu.matmul %161, %53, %cst_44 {dimension_numbers = #tpu.dot_dimension_numbers<[1], [0], [0], [1], [0, 0, 1, 1], [], []>} : vector<16x128xf32>, vector<128x32xf32>, vector<16x32xf32> -> vector<16x32xf32>
    %c7 = arith.constant 7 : index
    %c0_45 = arith.constant 0 : index
    %163 = vector.load %arg4[%c7, %c0_45] : memref<22x128xf32, #tpu.memory_space<vmem>>, vector<1x32xf32>
    %164 = vector.broadcast %163 : vector<1x32xf32> to vector<16x32xf32>
    %165 = arith.addf %162, %164 : vector<16x32xf32>
    %166 = arith.addf %144, %165 : vector<16x32xf32>
    %c8 = arith.constant 8 : index
    %c0_46 = arith.constant 0 : index
    %167 = vector.load %arg4[%c8, %c0_46] : memref<22x128xf32, #tpu.memory_space<vmem>>, vector<1x32xf32>
    %c9 = arith.constant 9 : index
    %c0_47 = arith.constant 0 : index
    %168 = vector.load %arg4[%c9, %c0_47] : memref<22x128xf32, #tpu.memory_space<vmem>>, vector<1x32xf32>
    %cst_48 = arith.constant dense<0.000000e+00> : vector<16xf32>
    %169 = vector.multi_reduction <add>, %166, %cst_48 [1] : vector<16x32xf32> to vector<16xf32>
    %170 = vector.shape_cast %169 : vector<16xf32> to vector<16x1xf32>
    %cst_49 = arith.constant 3.200000e+01 : f32
    %171 = vector.broadcast %cst_49 : f32 to vector<16x1xf32>
    %172 = arith.divf %170, %171 : vector<16x1xf32>
    %173 = vector.broadcast %172 : vector<16x1xf32> to vector<16x32xf32>
    %174 = arith.subf %166, %173 : vector<16x32xf32>
    %175 = arith.mulf %174, %174 : vector<16x32xf32>
    %cst_50 = arith.constant dense<0.000000e+00> : vector<16xf32>
    %176 = vector.multi_reduction <add>, %175, %cst_50 [1] : vector<16x32xf32> to vector<16xf32>
    %177 = vector.shape_cast %176 : vector<16xf32> to vector<16x1xf32>
    %cst_51 = arith.constant 3.200000e+01 : f32
    %178 = vector.broadcast %cst_51 : f32 to vector<16x1xf32>
    %179 = arith.divf %177, %178 : vector<16x1xf32>
    %180 = vector.broadcast %172 : vector<16x1xf32> to vector<16x32xf32>
    %181 = arith.subf %166, %180 : vector<16x32xf32>
    %cst_52 = arith.constant 9.99999996E-13 : f32
    %182 = vector.broadcast %cst_52 : f32 to vector<16x1xf32>
    %183 = arith.addf %179, %182 : vector<16x1xf32>
    %184 = math.rsqrt %183 : vector<16x1xf32>
    %185 = vector.broadcast %184 : vector<16x1xf32> to vector<16x32xf32>
    %186 = arith.mulf %181, %185 : vector<16x32xf32>
    %187 = vector.broadcast %167 : vector<1x32xf32> to vector<16x32xf32>
    %188 = arith.mulf %186, %187 : vector<16x32xf32>
    %189 = vector.broadcast %168 : vector<1x32xf32> to vector<16x32xf32>
    %190 = arith.addf %188, %189 : vector<16x32xf32>
    %c64_53 = arith.constant 64 : index
    %c0_54 = arith.constant 0 : index
    %191 = vector.load %arg3[%c64_53, %c0_54] : memref<160x128xf32, #tpu.memory_space<vmem>>, vector<32x128xf32>
    %c96 = arith.constant 96 : index
    %c0_55 = arith.constant 0 : index
    %192 = vector.load %arg3[%c96, %c0_55] : memref<160x128xf32, #tpu.memory_space<vmem>>, vector<32x128xf32>
    %c240 = arith.constant 240 : index
    %c0_56 = arith.constant 0 : index
    %193 = vector.load %arg2[%c240, %c0_56] : memref<432x32xf32, #tpu.memory_space<vmem>>, vector<32x32xf32>
    %c272 = arith.constant 272 : index
    %c0_57 = arith.constant 0 : index
    %194 = vector.load %arg2[%c272, %c0_57] : memref<432x32xf32, #tpu.memory_space<vmem>>, vector<128x32xf32>
    %cst_58 = arith.constant dense<0.000000e+00> : vector<16x128xf32>
    %195 = tpu.matmul %190, %191, %cst_58 {dimension_numbers = #tpu.dot_dimension_numbers<[1], [0], [0], [1], [0, 0, 1, 1], [], []>} : vector<16x32xf32>, vector<32x128xf32>, vector<16x128xf32> -> vector<16x128xf32>
    %c10 = arith.constant 10 : index
    %c0_59 = arith.constant 0 : index
    %196 = vector.load %arg4[%c10, %c0_59] : memref<22x128xf32, #tpu.memory_space<vmem>>, vector<1x128xf32>
    %197 = vector.broadcast %196 : vector<1x128xf32> to vector<16x128xf32>
    %198 = arith.addf %195, %197 : vector<16x128xf32>
    %199 = vector.shape_cast %198 : vector<16x128xf32> to vector<2x8x128xf32>
    %200 = vector.extract_strided_slice %199 {offsets = [0, 0, 0], sizes = [2, 8, 8], strides = [1, 1, 1]} : vector<2x8x128xf32> to vector<2x8x8xf32>
    %201 = vector.extract_strided_slice %199 {offsets = [0, 0, 8], sizes = [2, 8, 8], strides = [1, 1, 1]} : vector<2x8x128xf32> to vector<2x8x8xf32>
    %202 = vector.extract_strided_slice %199 {offsets = [0, 0, 16], sizes = [2, 8, 8], strides = [1, 1, 1]} : vector<2x8x128xf32> to vector<2x8x8xf32>
    %203 = vector.extract_strided_slice %199 {offsets = [0, 0, 24], sizes = [2, 8, 8], strides = [1, 1, 1]} : vector<2x8x128xf32> to vector<2x8x8xf32>
    %204 = vector.shape_cast %200 : vector<2x8x8xf32> to vector<1x2x8x8xf32>
    %205 = vector.shape_cast %201 : vector<2x8x8xf32> to vector<1x2x8x8xf32>
    %206 = vector.shape_cast %202 : vector<2x8x8xf32> to vector<1x2x8x8xf32>
    %207 = vector.shape_cast %203 : vector<2x8x8xf32> to vector<1x2x8x8xf32>
    %208 = tpu.concatenate %204, %205, %206, %207 in 0 : vector<1x2x8x8xf32>, vector<1x2x8x8xf32>, vector<1x2x8x8xf32>, vector<1x2x8x8xf32> -> vector<4x2x8x8xf32>
    %209 = vector.shape_cast %208 : vector<4x2x8x8xf32> to vector<8x8x8xf32>
    %210 = vector.extract_strided_slice %199 {offsets = [0, 0, 32], sizes = [2, 8, 8], strides = [1, 1, 1]} : vector<2x8x128xf32> to vector<2x8x8xf32>
    %211 = vector.extract_strided_slice %199 {offsets = [0, 0, 40], sizes = [2, 8, 8], strides = [1, 1, 1]} : vector<2x8x128xf32> to vector<2x8x8xf32>
    %212 = vector.extract_strided_slice %199 {offsets = [0, 0, 48], sizes = [2, 8, 8], strides = [1, 1, 1]} : vector<2x8x128xf32> to vector<2x8x8xf32>
    %213 = vector.extract_strided_slice %199 {offsets = [0, 0, 56], sizes = [2, 8, 8], strides = [1, 1, 1]} : vector<2x8x128xf32> to vector<2x8x8xf32>
    %214 = vector.shape_cast %210 : vector<2x8x8xf32> to vector<1x2x8x8xf32>
    %215 = vector.shape_cast %211 : vector<2x8x8xf32> to vector<1x2x8x8xf32>
    %216 = vector.shape_cast %212 : vector<2x8x8xf32> to vector<1x2x8x8xf32>
    %217 = vector.shape_cast %213 : vector<2x8x8xf32> to vector<1x2x8x8xf32>
    %218 = tpu.concatenate %214, %215, %216, %217 in 0 : vector<1x2x8x8xf32>, vector<1x2x8x8xf32>, vector<1x2x8x8xf32>, vector<1x2x8x8xf32> -> vector<4x2x8x8xf32>
    %219 = vector.shape_cast %218 : vector<4x2x8x8xf32> to vector<8x8x8xf32>
    %220 = vector.extract_strided_slice %199 {offsets = [0, 0, 64], sizes = [2, 8, 8], strides = [1, 1, 1]} : vector<2x8x128xf32> to vector<2x8x8xf32>
    %221 = vector.extract_strided_slice %199 {offsets = [0, 0, 72], sizes = [2, 8, 8], strides = [1, 1, 1]} : vector<2x8x128xf32> to vector<2x8x8xf32>
    %222 = vector.extract_strided_slice %199 {offsets = [0, 0, 80], sizes = [2, 8, 8], strides = [1, 1, 1]} : vector<2x8x128xf32> to vector<2x8x8xf32>
    %223 = vector.extract_strided_slice %199 {offsets = [0, 0, 88], sizes = [2, 8, 8], strides = [1, 1, 1]} : vector<2x8x128xf32> to vector<2x8x8xf32>
    %224 = vector.shape_cast %220 : vector<2x8x8xf32> to vector<1x2x8x8xf32>
    %225 = vector.shape_cast %221 : vector<2x8x8xf32> to vector<1x2x8x8xf32>
    %226 = vector.shape_cast %222 : vector<2x8x8xf32> to vector<1x2x8x8xf32>
    %227 = vector.shape_cast %223 : vector<2x8x8xf32> to vector<1x2x8x8xf32>
    %228 = tpu.concatenate %224, %225, %226, %227 in 0 : vector<1x2x8x8xf32>, vector<1x2x8x8xf32>, vector<1x2x8x8xf32>, vector<1x2x8x8xf32> -> vector<4x2x8x8xf32>
    %229 = vector.shape_cast %228 : vector<4x2x8x8xf32> to vector<8x8x8xf32>
    "tpu.trace_start"() <{level = 10 : i32, message = "nqd,nkd->nqk"}> : () -> ()
    %cst_60 = arith.constant dense<0.000000e+00> : vector<8x8x8xf32>
    %230 = tpu.matmul %209, %219, %cst_60 {dimension_numbers = #tpu.dot_dimension_numbers<[2], [2], [1], [1], [0, 0, 0, 1, 1, 1], [0], [0]>} : vector<8x8x8xf32>, vector<8x8x8xf32>, vector<8x8x8xf32> -> vector<8x8x8xf32>
    "tpu.trace_stop"() : () -> ()
    %cst_61 = arith.constant 0.353553385 : f32
    %231 = vector.broadcast %cst_61 : f32 to vector<8x8x8xf32>
    %232 = arith.mulf %230, %231 : vector<8x8x8xf32>
    %233 = vector.broadcast %49 : vector<8x1x8xf32> to vector<8x8x8xf32>
    %234 = arith.addf %232, %233 : vector<8x8x8xf32>
    %cst_62 = arith.constant dense<0xFF800000> : vector<8x8xf32>
    %235 = vector.multi_reduction <maximumf>, %234, %cst_62 [2] : vector<8x8x8xf32> to vector<8x8xf32>
    %236 = vector.shape_cast %235 : vector<8x8xf32> to vector<8x8x1xf32>
    %237 = vector.broadcast %236 : vector<8x8x1xf32> to vector<8x8x8xf32>
    %238 = arith.subf %234, %237 : vector<8x8x8xf32>
    %239 = math.exp %238 : vector<8x8x8xf32>
    %cst_63 = arith.constant dense<0.000000e+00> : vector<8x8xf32>
    %240 = vector.multi_reduction <add>, %239, %cst_63 [2] : vector<8x8x8xf32> to vector<8x8xf32>
    %241 = vector.shape_cast %240 : vector<8x8xf32> to vector<8x8x1xf32>
    %242 = tpu.reciprocal %241 {approx = true} : vector<8x8x1xf32> -> vector<8x8x1xf32>
    %243 = vector.broadcast %242 : vector<8x8x1xf32> to vector<8x8x8xf32>
    %244 = arith.mulf %239, %243 : vector<8x8x8xf32>
    "tpu.trace_start"() <{level = 10 : i32, message = "nqk,nkd->nqd"}> : () -> ()
    %cst_64 = arith.constant dense<0.000000e+00> : vector<8x8x8xf32>
    %245 = tpu.matmul %244, %229, %cst_64 {dimension_numbers = #tpu.dot_dimension_numbers<[2], [1], [1], [2], [0, 0, 0, 1, 1, 2], [0], [0]>} : vector<8x8x8xf32>, vector<8x8x8xf32>, vector<8x8x8xf32> -> vector<8x8x8xf32>
    "tpu.trace_stop"() : () -> ()
    %246 = vector.shape_cast %245 : vector<8x8x8xf32> to vector<4x2x8x8xf32>
    %247 = vector.extract_strided_slice %246 {offsets = [0, 0, 0, 0], sizes = [1, 2, 8, 8], strides = [1, 1, 1, 1]} : vector<4x2x8x8xf32> to vector<1x2x8x8xf32>
    %248 = vector.shape_cast %247 : vector<1x2x8x8xf32> to vector<2x8x8xf32>
    %249 = vector.extract_strided_slice %246 {offsets = [1, 0, 0, 0], sizes = [1, 2, 8, 8], strides = [1, 1, 1, 1]} : vector<4x2x8x8xf32> to vector<1x2x8x8xf32>
    %250 = vector.shape_cast %249 : vector<1x2x8x8xf32> to vector<2x8x8xf32>
    %251 = vector.extract_strided_slice %246 {offsets = [2, 0, 0, 0], sizes = [1, 2, 8, 8], strides = [1, 1, 1, 1]} : vector<4x2x8x8xf32> to vector<1x2x8x8xf32>
    %252 = vector.shape_cast %251 : vector<1x2x8x8xf32> to vector<2x8x8xf32>
    %253 = vector.extract_strided_slice %246 {offsets = [3, 0, 0, 0], sizes = [1, 2, 8, 8], strides = [1, 1, 1, 1]} : vector<4x2x8x8xf32> to vector<1x2x8x8xf32>
    %254 = vector.shape_cast %253 : vector<1x2x8x8xf32> to vector<2x8x8xf32>
    %255 = tpu.concatenate %248, %250, %252, %254 in 2 : vector<2x8x8xf32>, vector<2x8x8xf32>, vector<2x8x8xf32>, vector<2x8x8xf32> -> vector<2x8x32xf32>
    %256 = vector.shape_cast %255 : vector<2x8x32xf32> to vector<16x32xf32>
    %cst_65 = arith.constant dense<0.000000e+00> : vector<16x32xf32>
    %257 = tpu.matmul %256, %193, %cst_65 {dimension_numbers = #tpu.dot_dimension_numbers<[1], [0], [0], [1], [0, 0, 1, 1], [], []>} : vector<16x32xf32>, vector<32x32xf32>, vector<16x32xf32> -> vector<16x32xf32>
    %c11 = arith.constant 11 : index
    %c0_66 = arith.constant 0 : index
    %258 = vector.load %arg4[%c11, %c0_66] : memref<22x128xf32, #tpu.memory_space<vmem>>, vector<1x32xf32>
    %259 = vector.broadcast %258 : vector<1x32xf32> to vector<16x32xf32>
    %260 = arith.addf %257, %259 : vector<16x32xf32>
    %261 = arith.addf %190, %260 : vector<16x32xf32>
    %c12 = arith.constant 12 : index
    %c0_67 = arith.constant 0 : index
    %262 = vector.load %arg4[%c12, %c0_67] : memref<22x128xf32, #tpu.memory_space<vmem>>, vector<1x32xf32>
    %c13 = arith.constant 13 : index
    %c0_68 = arith.constant 0 : index
    %263 = vector.load %arg4[%c13, %c0_68] : memref<22x128xf32, #tpu.memory_space<vmem>>, vector<1x32xf32>
    %cst_69 = arith.constant dense<0.000000e+00> : vector<16xf32>
    %264 = vector.multi_reduction <add>, %261, %cst_69 [1] : vector<16x32xf32> to vector<16xf32>
    %265 = vector.shape_cast %264 : vector<16xf32> to vector<16x1xf32>
    %cst_70 = arith.constant 3.200000e+01 : f32
    %266 = vector.broadcast %cst_70 : f32 to vector<16x1xf32>
    %267 = arith.divf %265, %266 : vector<16x1xf32>
    %268 = vector.broadcast %267 : vector<16x1xf32> to vector<16x32xf32>
    %269 = arith.subf %261, %268 : vector<16x32xf32>
    %270 = arith.mulf %269, %269 : vector<16x32xf32>
    %cst_71 = arith.constant dense<0.000000e+00> : vector<16xf32>
    %271 = vector.multi_reduction <add>, %270, %cst_71 [1] : vector<16x32xf32> to vector<16xf32>
    %272 = vector.shape_cast %271 : vector<16xf32> to vector<16x1xf32>
    %cst_72 = arith.constant 3.200000e+01 : f32
    %273 = vector.broadcast %cst_72 : f32 to vector<16x1xf32>
    %274 = arith.divf %272, %273 : vector<16x1xf32>
    %275 = vector.broadcast %267 : vector<16x1xf32> to vector<16x32xf32>
    %276 = arith.subf %261, %275 : vector<16x32xf32>
    %cst_73 = arith.constant 9.99999996E-13 : f32
    %277 = vector.broadcast %cst_73 : f32 to vector<16x1xf32>
    %278 = arith.addf %274, %277 : vector<16x1xf32>
    %279 = math.rsqrt %278 : vector<16x1xf32>
    %280 = vector.broadcast %279 : vector<16x1xf32> to vector<16x32xf32>
    %281 = arith.mulf %276, %280 : vector<16x32xf32>
    %282 = vector.broadcast %262 : vector<1x32xf32> to vector<16x32xf32>
    %283 = arith.mulf %281, %282 : vector<16x32xf32>
    %284 = vector.broadcast %263 : vector<1x32xf32> to vector<16x32xf32>
    %285 = arith.addf %283, %284 : vector<16x32xf32>
    %cst_74 = arith.constant dense<0.000000e+00> : vector<16x128xf32>
    %286 = tpu.matmul %285, %192, %cst_74 {dimension_numbers = #tpu.dot_dimension_numbers<[1], [0], [0], [1], [0, 0, 1, 1], [], []>} : vector<16x32xf32>, vector<32x128xf32>, vector<16x128xf32> -> vector<16x128xf32>
    %c14 = arith.constant 14 : index
    %c0_75 = arith.constant 0 : index
    %287 = vector.load %arg4[%c14, %c0_75] : memref<22x128xf32, #tpu.memory_space<vmem>>, vector<1x128xf32>
    %288 = vector.broadcast %287 : vector<1x128xf32> to vector<16x128xf32>
    %289 = arith.addf %286, %288 : vector<16x128xf32>
    %290 = arith.mulf %289, %289 : vector<16x128xf32>
    %291 = arith.mulf %289, %290 : vector<16x128xf32>
    %cst_76 = arith.constant 4.471500e-02 : f32
    %292 = vector.broadcast %cst_76 : f32 to vector<16x128xf32>
    %293 = arith.mulf %292, %291 : vector<16x128xf32>
    %294 = arith.addf %289, %293 : vector<16x128xf32>
    %cst_77 = arith.constant 0.797884583 : f32
    %295 = vector.broadcast %cst_77 : f32 to vector<16x128xf32>
    %296 = arith.mulf %295, %294 : vector<16x128xf32>
    %297 = math.tanh %296 : vector<16x128xf32>
    %cst_78 = arith.constant 1.000000e+00 : f32
    %298 = vector.broadcast %cst_78 : f32 to vector<16x128xf32>
    %299 = arith.addf %298, %297 : vector<16x128xf32>
    %cst_79 = arith.constant 5.000000e-01 : f32
    %300 = vector.broadcast %cst_79 : f32 to vector<16x128xf32>
    %301 = arith.mulf %300, %299 : vector<16x128xf32>
    %302 = arith.mulf %289, %301 : vector<16x128xf32>
    %cst_80 = arith.constant dense<0.000000e+00> : vector<16x32xf32>
    %303 = tpu.matmul %302, %194, %cst_80 {dimension_numbers = #tpu.dot_dimension_numbers<[1], [0], [0], [1], [0, 0, 1, 1], [], []>} : vector<16x128xf32>, vector<128x32xf32>, vector<16x32xf32> -> vector<16x32xf32>
    %c15 = arith.constant 15 : index
    %c0_81 = arith.constant 0 : index
    %304 = vector.load %arg4[%c15, %c0_81] : memref<22x128xf32, #tpu.memory_space<vmem>>, vector<1x32xf32>
    %305 = vector.broadcast %304 : vector<1x32xf32> to vector<16x32xf32>
    %306 = arith.addf %303, %305 : vector<16x32xf32>
    %307 = arith.addf %285, %306 : vector<16x32xf32>
    %c16 = arith.constant 16 : index
    %c0_82 = arith.constant 0 : index
    %308 = vector.load %arg4[%c16, %c0_82] : memref<22x128xf32, #tpu.memory_space<vmem>>, vector<1x32xf32>
    %c17 = arith.constant 17 : index
    %c0_83 = arith.constant 0 : index
    %309 = vector.load %arg4[%c17, %c0_83] : memref<22x128xf32, #tpu.memory_space<vmem>>, vector<1x32xf32>
    %cst_84 = arith.constant dense<0.000000e+00> : vector<16xf32>
    %310 = vector.multi_reduction <add>, %307, %cst_84 [1] : vector<16x32xf32> to vector<16xf32>
    %311 = vector.shape_cast %310 : vector<16xf32> to vector<16x1xf32>
    %cst_85 = arith.constant 3.200000e+01 : f32
    %312 = vector.broadcast %cst_85 : f32 to vector<16x1xf32>
    %313 = arith.divf %311, %312 : vector<16x1xf32>
    %314 = vector.broadcast %313 : vector<16x1xf32> to vector<16x32xf32>
    %315 = arith.subf %307, %314 : vector<16x32xf32>
    %316 = arith.mulf %315, %315 : vector<16x32xf32>
    %cst_86 = arith.constant dense<0.000000e+00> : vector<16xf32>
    %317 = vector.multi_reduction <add>, %316, %cst_86 [1] : vector<16x32xf32> to vector<16xf32>
    %318 = vector.shape_cast %317 : vector<16xf32> to vector<16x1xf32>
    %cst_87 = arith.constant 3.200000e+01 : f32
    %319 = vector.broadcast %cst_87 : f32 to vector<16x1xf32>
    %320 = arith.divf %318, %319 : vector<16x1xf32>
    %321 = vector.broadcast %313 : vector<16x1xf32> to vector<16x32xf32>
    %322 = arith.subf %307, %321 : vector<16x32xf32>
    %cst_88 = arith.constant 9.99999996E-13 : f32
    %323 = vector.broadcast %cst_88 : f32 to vector<16x1xf32>
    %324 = arith.addf %320, %323 : vector<16x1xf32>
    %325 = math.rsqrt %324 : vector<16x1xf32>
    %326 = vector.broadcast %325 : vector<16x1xf32> to vector<16x32xf32>
    %327 = arith.mulf %322, %326 : vector<16x32xf32>
    %328 = vector.broadcast %308 : vector<1x32xf32> to vector<16x32xf32>
    %329 = arith.mulf %327, %328 : vector<16x32xf32>
    %330 = vector.broadcast %309 : vector<1x32xf32> to vector<16x32xf32>
    %331 = arith.addf %329, %330 : vector<16x32xf32>
    %c400 = arith.constant 400 : index
    %c0_89 = arith.constant 0 : index
    %332 = vector.load %arg2[%c400, %c0_89] : memref<432x32xf32, #tpu.memory_space<vmem>>, vector<32x32xf32>
    %c128 = arith.constant 128 : index
    %c0_90 = arith.constant 0 : index
    %333 = vector.load %arg3[%c128, %c0_90] : memref<160x128xf32, #tpu.memory_space<vmem>>, vector<32x128xf32>
    %334 = vector.shape_cast %331 : vector<16x32xf32> to vector<2x8x32xf32>
    %335 = vector.extract_strided_slice %334 {offsets = [0, 0, 0], sizes = [2, 1, 32], strides = [1, 1, 1]} : vector<2x8x32xf32> to vector<2x1x32xf32>
    %336 = vector.shape_cast %335 : vector<2x1x32xf32> to vector<2x32xf32>
    %cst_91 = arith.constant dense<0.000000e+00> : vector<2x32xf32>
    %337 = tpu.matmul %336, %332, %cst_91 {dimension_numbers = #tpu.dot_dimension_numbers<[1], [0], [0], [1], [0, 0, 1, 1], [], []>} : vector<2x32xf32>, vector<32x32xf32>, vector<2x32xf32> -> vector<2x32xf32>
    %c18 = arith.constant 18 : index
    %c0_92 = arith.constant 0 : index
    %338 = vector.load %arg4[%c18, %c0_92] : memref<22x128xf32, #tpu.memory_space<vmem>>, vector<1x32xf32>
    %339 = vector.broadcast %338 : vector<1x32xf32> to vector<2x32xf32>
    %340 = arith.addf %337, %339 : vector<2x32xf32>
    %341 = math.tanh %340 : vector<2x32xf32>
    %c19 = arith.constant 19 : index
    %c0_93 = arith.constant 0 : index
    %342 = vector.load %arg4[%c19, %c0_93] : memref<22x128xf32, #tpu.memory_space<vmem>>, vector<1x32xf32>
    %c20 = arith.constant 20 : index
    %c0_94 = arith.constant 0 : index
    %343 = vector.load %arg4[%c20, %c0_94] : memref<22x128xf32, #tpu.memory_space<vmem>>, vector<1x32xf32>
    %cst_95 = arith.constant dense<0.000000e+00> : vector<2xf32>
    %344 = vector.multi_reduction <add>, %341, %cst_95 [1] : vector<2x32xf32> to vector<2xf32>
    %345 = vector.shape_cast %344 : vector<2xf32> to vector<2x1xf32>
    %cst_96 = arith.constant 3.200000e+01 : f32
    %346 = vector.broadcast %cst_96 : f32 to vector<2x1xf32>
    %347 = arith.divf %345, %346 : vector<2x1xf32>
    %348 = vector.broadcast %347 : vector<2x1xf32> to vector<2x32xf32>
    %349 = arith.subf %341, %348 : vector<2x32xf32>
    %350 = arith.mulf %349, %349 : vector<2x32xf32>
    %cst_97 = arith.constant dense<0.000000e+00> : vector<2xf32>
    %351 = vector.multi_reduction <add>, %350, %cst_97 [1] : vector<2x32xf32> to vector<2xf32>
    %352 = vector.shape_cast %351 : vector<2xf32> to vector<2x1xf32>
    %cst_98 = arith.constant 3.200000e+01 : f32
    %353 = vector.broadcast %cst_98 : f32 to vector<2x1xf32>
    %354 = arith.divf %352, %353 : vector<2x1xf32>
    %355 = vector.broadcast %347 : vector<2x1xf32> to vector<2x32xf32>
    %356 = arith.subf %341, %355 : vector<2x32xf32>
    %cst_99 = arith.constant 9.99999974E-6 : f32
    %357 = vector.broadcast %cst_99 : f32 to vector<2x1xf32>
    %358 = arith.addf %354, %357 : vector<2x1xf32>
    %359 = math.rsqrt %358 : vector<2x1xf32>
    %360 = vector.broadcast %359 : vector<2x1xf32> to vector<2x32xf32>
    %361 = arith.mulf %356, %360 : vector<2x32xf32>
    %362 = vector.broadcast %342 : vector<1x32xf32> to vector<2x32xf32>
    %363 = arith.mulf %361, %362 : vector<2x32xf32>
    %364 = vector.broadcast %343 : vector<1x32xf32> to vector<2x32xf32>
    %365 = arith.addf %363, %364 : vector<2x32xf32>
    %cst_100 = arith.constant dense<0.000000e+00> : vector<2x128xf32>
    %366 = tpu.matmul %365, %333, %cst_100 {dimension_numbers = #tpu.dot_dimension_numbers<[1], [0], [0], [1], [0, 0, 1, 1], [], []>} : vector<2x32xf32>, vector<32x128xf32>, vector<2x128xf32> -> vector<2x128xf32>
    %c21 = arith.constant 21 : index
    %c0_101 = arith.constant 0 : index
    %367 = vector.load %arg4[%c21, %c0_101] : memref<22x128xf32, #tpu.memory_space<vmem>>, vector<1x128xf32>
    %368 = vector.broadcast %367 : vector<1x128xf32> to vector<2x128xf32>
    %369 = arith.addf %366, %368 : vector<2x128xf32>
    %c0_102 = arith.constant 0 : index
    %c0_103 = arith.constant 0 : index
    %370 = vector.load %arg5[%c0_102, %c0_103] : memref<2x128xf32, #tpu.memory_space<vmem>>, vector<2x128xf32>
    tpu.vector_store %arg5[%c0_102, %c0_103], %369 {strides = array<i32>} : memref<2x128xf32, #tpu.memory_space<vmem>>, vector<2x128xf32>,
    return
  }
}

</mosaic_0001>

<llo_original>
// kernel: dpr_forward.1
$region0: #{dpr_forward.1}
  #allocation0 [shape = 'u32[]', space=smem, size = 0x4, offset = 0x4, fixed_abs, tag = 'smem constant byte address 0x4 - core index']
  #allocation1 [shape = 'u32[72,128]{1,0:T(1,128)}', space=vmem, size = 0x9000, scoped, tag = 'internal scratch']
  %s0 = inlined_call_operand.vmem [shape: s32[16,1], index: 0, kind: input, shape index: {}]
  %s1 = inlined_call_operand.vmem [shape: s32[2,1,8], index: 1, kind: input, shape index: {}]
  %s2 = inlined_call_operand.hbm [shape: f32[432,32], index: 2, kind: input, shape index: {}]
  %s3 = inlined_call_operand.hbm [shape: f32[160,128], index: 3, kind: input, shape index: {}]
  %s4 = inlined_call_operand.hbm [shape: f32[22,128], index: 4, kind: input, shape index: {}]
  %s5 = inlined_call_operand.hbm [shape: f32[2,128], index: 5, kind: output, shape index: {}]
  %s6 = sld [smem:[#allocation0]]
  $region42: #{dpr_forward.1} parent=0
    _
  %s8 = ssub.s32 1, %s6
  %s9 = scalar_select 0, %s8, %s6
  $region1: #{dpr_forward.1} parent=0
    #allocation2 [shape = 'u8[221184]{0}', space=vmem, size = 0x36000, scoped, tag = 'input window, operand 2, single buffered']
    #allocation3 [shape = 's32[1]{0}', space=sflag, size = 0x4, scoped, tag = 'scoped memory for dpr_forward.1']
    #allocation4 [shape = 's32[1]{0}', space=sflag, size = 0x4, scoped, tag = 'scoped memory for dpr_forward.1']
    #allocation5 [shape = 'u8[81920]{0}', space=vmem, size = 0x14000, scoped, tag = 'input window, operand 3, single buffered']
    #allocation6 [shape = 's32[1]{0}', space=sflag, size = 0x4, scoped, tag = 'scoped memory for dpr_forward.1']
    #allocation7 [shape = 'u8[12288]{0}', space=vmem, size = 0x3000, scoped, tag = 'input window, operand 4, single buffered']
    #allocation8 [shape = 'u8[1024]{0}', space=vmem, size = 0x400, scoped, tag = 'output window, operand 0, single buffered']
    %10 = vsyncpa [#allocation3], 0
    %11 = vsyncpa [#allocation6], 0
    %12 = vsyncpa [#allocation4], 0
    // Predicated region
    $region2: #{dpr_forward.1} parent=1 // pred_check
      _
    $region3: #{dpr_forward.1} parent=1 // pred_check_branch
      %14 = sbr.rel (0) target = $region5
    $region4: #{dpr_forward.1} parent=1 // pred_region
      _
    $region5: #{dpr_forward.1} parent=1 // pred_fallthru
      _
    // Predicated region
    $region6: #{dpr_forward.1} parent=1 // pred_check
      _
    $region7: #{dpr_forward.1} parent=1 // pred_check_branch
      %16 = sbr.rel (0) target = $region9
    $region8: #{dpr_forward.1} parent=1 // pred_region
      _
    $region9: #{dpr_forward.1} parent=1 // pred_fallthru
      _
    // Predicated region
    $region10: #{dpr_forward.1} parent=1 // pred_check
      _
    $region11: #{dpr_forward.1} parent=1 // pred_check_branch
      %18 = sbr.rel (0) target = $region13
    $region12: #{dpr_forward.1} parent=1 // pred_region
      %20 = vsyncadd [#allocation3], 0
      %s21 = sshll.u32 %s2, 4
      %s22 = int_to_ptr.hbm [resolvable:$true] %s21
      %s23 = sshll.u32 [#allocation2], 4
      %s24 = int_to_ptr.vmem [resolvable:$true] %s23
      %29 = dma.hbm_to_vmem [thread:$0]  %s22, 6912, %s24, [#allocation3], 128, 128, 8
    $region13: #{dpr_forward.1} parent=1 // pred_fallthru
      _
    // Predicated region
    $region14: #{dpr_forward.1} parent=1 // pred_check
      _
    $region15: #{dpr_forward.1} parent=1 // pred_check_branch
      %31 = sbr.rel (0) target = $region17
    $region16: #{dpr_forward.1} parent=1 // pred_region
      %33 = vsyncadd [#allocation6], 0
      %s34 = sshll.u32 %s3, 4
      %s35 = int_to_ptr.hbm [resolvable:$true] %s34
      %s36 = sshll.u32 [#allocation5], 4
      %s37 = int_to_ptr.vmem [resolvable:$true] %s36
      %42 = dma.hbm_to_vmem [thread:$0]  %s35, 2560, %s37, [#allocation6], 128, 128, 8
    $region17: #{dpr_forward.1} parent=1 // pred_fallthru
      _
    // Predicated region
    $region18: #{dpr_forward.1} parent=1 // pred_check
      _
    $region19: #{dpr_forward.1} parent=1 // pred_check_branch
      %44 = sbr.rel (0) target = $region21
    $region20: #{dpr_forward.1} parent=1 // pred_region
      %46 = vsyncadd [#allocation6], 0
      %s47 = sshll.u32 %s4, 4
      %s48 = int_to_ptr.hbm [resolvable:$true] %s47
      %s49 = sshll.u32 [#allocation7], 4
      %s50 = int_to_ptr.vmem [resolvable:$true] %s49
      %55 = dma.hbm_to_vmem [thread:$0]  %s48, 384, %s50, [#allocation6], 128, 128, 8
    $region21: #{dpr_forward.1} parent=1 // pred_fallthru
      _
    // Predicated region
    $region22: #{dpr_forward.1} parent=1 // pred_check
      _
    $region23: #{dpr_forward.1} parent=1 // pred_check_branch
      %57 = sbr.rel (0) target = $region25
    $region24: #{dpr_forward.1} parent=1 // pred_region
      %59 = dma.done [#allocation3], 6912
    $region25: #{dpr_forward.1} parent=1 // pred_fallthru
      _
    // Predicated region
    $region26: #{dpr_forward.1} parent=1 // pred_check
      _
    $region27: #{dpr_forward.1} parent=1 // pred_check_branch
      %61 = sbr.rel (0) target = $region29
    $region28: #{dpr_forward.1} parent=1 // pred_region
      %63 = dma.done [#allocation6], 2560
    $region29: #{dpr_forward.1} parent=1 // pred_fallthru
      _
    // Predicated region
    $region30: #{dpr_forward.1} parent=1 // pred_check
      _
    $region31: #{dpr_forward.1} parent=1 // pred_check_branch
      %65 = sbr.rel (0) target = $region33
    $region32: #{dpr_forward.1} parent=1 // pred_region
      %67 = dma.done [#allocation6], 384
    $region33: #{dpr_forward.1} parent=1 // pred_fallthru
      _
    %v68 = vld [vmem:[%s0] sm:$0xff]
    %v69 = vld [vmem:[%s0 + $0x8] sm:$0xff]
    %v70 = vlaneseq
    %v71 = vand.u32 %v70, 127
    %72 = vset.pattern.permute.xlu0 0
    %73 = vperm.xlu0 %72, %v68
    %v74 = vpop.permute.xlu0 %73
    %75 = vset.pattern.permute.xlu0 0
    %76 = vperm.xlu0 %75, %v69
    %v77 = vpop.permute.xlu0 %76
    %vm78 = vcmp.eq.s32.totalorder %v74, %v71
    %vm79 = vcmp.eq.s32.totalorder %v77, %v71
    %v80 = vsel %vm78, 1, 0
    %v81 = vsel %vm79, 1, 0
    %v82 = vcvt.s32.f32 %v80
    %v83 = vcvt.s32.f32 %v81
    %v84 = vld [vmem:[#allocation2] sm:$0xff]
    %v85 = vld [vmem:[#allocation2 + $0x8] sm:$0xff]
    %v86 = vld [vmem:[#allocation2 + $0x10] sm:$0xff]
    %v87 = vld [vmem:[#allocation2 + $0x18] sm:$0xff]
    %v88 = vld [vmem:[#allocation2 + $0x20] sm:$0xff]
    %v89 = vld [vmem:[#allocation2 + $0x28] sm:$0xff]
    %v90 = vld [vmem:[#allocation2 + $0x30] sm:$0xff]
    %v91 = vld [vmem:[#allocation2 + $0x38] sm:$0xff]
    %vm92 = vcmask 523264
    %v94 = vsel %vm92, %v82, 0
    %v97 = vsel %vm92, %v83, 0
    %99 = vmatpush.msra.mxu0 0.0
    %100 = vmatpush.msra.mxu0 0.0
    %101 = vmatpush.msra.mxu0 0.0
    %102 = vmatpush.msra.mxu0 0.0
    %103 = vmatpush.msra.mxu0 0.0
    %104 = vmatpush.msra.mxu0 0.0
    %105 = vmatpush.msra.mxu0 0.0
    %106 = vmatpush.msra.mxu0 0.0
    %107 = vmatpush.msra.mxu0 %v91
    %108 = vmatpush.msra.mxu0 %v90
    %109 = vmatpush.msra.mxu0 %v89
    %110 = vmatpush.msra.mxu0 %v88
    %111 = vmatpush.msra.mxu0 %v87
    %112 = vmatpush.msra.mxu0 %v86
    %113 = vmatpush.msra.mxu0 %v85
    %114 = vmatpush.msra.mxu0 %v84
    %115 = vmatmul.f32.gmra.mxu0 %v94
    %v116 = vpop.f32.mrf.mxu0
    %v117 = vadd.f32 0.0, %v116
    %118 = vmatmul.f32.gmra.mxu0 %v97
    %v119 = vpop.f32.mrf.mxu0
    %v120 = vadd.f32 0.0, %v119
    %121 = vdwg.mxu0
    %v122 = vld [vmem:[#allocation2 + $0x40] sm:$0xff]
    %v123 = vadd.f32 %v117, %v122
    %v124 = vadd.f32 %v120, %v122
    %v125 = vld [vmem:[#allocation7] sm:$0x1]
    %v126 = vld [vmem:[#allocation7 + $0x1] sm:$0x1]
    %vm127 = vcmask 261120
    %v128 = vsel %vm127, %v123, 0.0
    %129 = vadd.xlane.f32.xlu0 %v128
    %v130 = vpop.xlane.xlu0 %129
    %v131 = vsel %vm127, %v124, 0.0
    %132 = vadd.xlane.f32.xlu0 %v131
    %v133 = vpop.xlane.xlu0 %132
    %v134 = vrcp.pop 32.0
    %v135 = vmul.f32 32.0, %v134
    %v136 = vsub.f32 1.0, %v135
    %v137 = vmul.f32 %v134, %v136
    %v138 = vadd.f32 %v134, %v137
    %vm139 = vweird.f32 %v134
    %v140 = vsel %vm139, %v134, %v138
    %v141 = vmul.f32 %v130, %v140
    %v142 = vmul.f32 %v133, %v140
    %v143 = vsub.f32 %v123, %v141
    %v144 = vsub.f32 %v124, %v142
    %v145 = vmul.f32 %v143, %v143
    %v146 = vmul.f32 %v144, %v144
    %v147 = vsel %vm127, %v145, 0.0
    %148 = vadd.xlane.f32.xlu0 %v147
    %v149 = vpop.xlane.xlu0 %148
    %v150 = vsel %vm127, %v146, 0.0
    %151 = vadd.xlane.f32.xlu0 %v150
    %v152 = vpop.xlane.xlu0 %151
    %v153 = vmul.f32 %v149, %v140
    %v154 = vmul.f32 %v152, %v140
    %v155 = vadd.f32 %v153, 1e-12
    %v156 = vadd.f32 %v154, 1e-12
    %v157 = vrsqrt.pop %v155
    %v158 = vmul.f32 %v157, %v155
    %v159 = vmul.f32 %v158, %v157
    %v160 = vmul.f32 0.5, %v159
    %v161 = vsub.f32 1.5, %v160
    %v162 = vmul.f32 %v157, %v161
    %vm163 = vweird.f32 %v155
    %vm164 = vweird.f32 %v157
    %vm165 = vmor %vm163, %vm164
    %v166 = vsel %vm165, %v157, %v162
    %v167 = vrsqrt.pop %v156
    %v168 = vmul.f32 %v167, %v156
    %v169 = vmul.f32 %v168, %v167
    %v170 = vmul.f32 0.5, %v169
    %v171 = vsub.f32 1.5, %v170
    %v172 = vmul.f32 %v167, %v171
    %vm173 = vweird.f32 %v156
    %vm174 = vweird.f32 %v167
    %vm175 = vmor %vm173, %vm174
    %v176 = vsel %vm175, %v167, %v172
    %v177 = vmul.f32 %v143, %v166
    %v178 = vmul.f32 %v144, %v176
    %v179 = vperm.slane %v125, 0
    %v180 = vmul.f32 %v177, %v179
    %v181 = vmul.f32 %v178, %v179
    %v182 = vperm.slane %v126, 0
    %v183 = vadd.f32 %v180, %v182
    %v184 = vadd.f32 %v181, %v182
    %v185 = vld [vmem:[%s1] sm:$0x1]
    %v186 = vld [vmem:[%s1 + $0x1] sm:$0x1]
    %v187 = vcvt.s32.f32 %v185
    %v188 = vcvt.s32.f32 %v186
    %v189 = vsub.f32 1.0, %v187
    %v190 = vsub.f32 1.0, %v188
    %v191 = vmul.f32 %v189, -1e+09
    %v192 = vmul.f32 %v190, -1e+09
    %v193 = vld [vmem:[#allocation5] sm:$0xff]
    %v194 = vld [vmem:[#allocation5 + $0x8] sm:$0xff]
    %v195 = vld [vmem:[#allocation5 + $0x10] sm:$0xff]
    %v196 = vld [vmem:[#allocation5 + $0x18] sm:$0xff]
    %v197 = vld [vmem:[#allocation5 + $0x20] sm:$0xff]
    %v198 = vld [vmem:[#allocation5 + $0x28] sm:$0xff]
    %v199 = vld [vmem:[#allocation5 + $0x30] sm:$0xff]
    %v200 = vld [vmem:[#allocation5 + $0x38] sm:$0xff]
    %v201 = vld [vmem:[#allocation2 + $0x50] sm:$0xff]
    %v202 = vld [vmem:[#allocation2 + $0x58] sm:$0xff]
    %v203 = vld [vmem:[#allocation2 + $0x60] sm:$0xff]
    %v204 = vld [vmem:[#allocation2 + $0x68] sm:$0xff]
    %v205 = vld [vmem:[#allocation2 + $0x70] sm:$0xff]
    %v206 = vld [vmem:[#allocation2 + $0x78] sm:$0xff]
    %v207 = vld [vmem:[#allocation2 + $0x80] sm:$0xff]
    %v208 = vld [vmem:[#allocation2 + $0x88] sm:$0xff]
    %v209 = vld [vmem:[#allocation2 + $0x90] sm:$0xff]
    %v210 = vld [vmem:[#allocation2 + $0x98] sm:$0xff]
    %v211 = vld [vmem:[#allocation2 + $0xa0] sm:$0xff]
    %v212 = vld [vmem:[#allocation2 + $0xa8] sm:$0xff]
    %v213 = vld [vmem:[#allocation2 + $0xb0] sm:$0xff]
    %v214 = vld [vmem:[#allocation2 + $0xb8] sm:$0xff]
    %v215 = vld [vmem:[#allocation2 + $0xc0] sm:$0xff]
    %v216 = vld [vmem:[#allocation2 + $0xc8] sm:$0xff]
    %v217 = vld [vmem:[#allocation2 + $0xd0] sm:$0xff]
    %v218 = vld [vmem:[#allocation2 + $0xd8] sm:$0xff]
    %v219 = vld [vmem:[#allocation2 + $0xe0] sm:$0xff]
    %v220 = vld [vmem:[#allocation2 + $0xe8] sm:$0xff]
    %v221 = vld [vmem:[#allocation7 + $0x2] sm:$0x1]
    %v222 = vperm.slane %v221, 0
    %v224 = vsel %vm127, %v183, 0
    %v227 = vsel %vm127, %v184, 0
    %229 = vmatpush.msra.mxu0 0.0
    %230 = vmatpush.msra.mxu0 0.0
    %231 = vmatpush.msra.mxu0 0.0
    %232 = vmatpush.msra.mxu0 0.0
    %233 = vmatpush.msra.mxu0 0.0
    %234 = vmatpush.msra.mxu0 0.0
    %235 = vmatpush.msra.mxu0 0.0
    %236 = vmatpush.msra.mxu0 0.0
    %237 = vmatpush.msra.mxu0 0.0
    %238 = vmatpush.msra.mxu0 0.0
    %239 = vmatpush.msra.mxu0 0.0
    %240 = vmatpush.msra.mxu0 0.0
    %241 = vmatpush.msra.mxu0 %v196
    %242 = vmatpush.msra.mxu0 %v195
    %243 = vmatpush.msra.mxu0 %v194
    %244 = vmatpush.msra.mxu0 %v193
    %245 = vmatmul.f32.gmra.mxu0 %v224
    %v246 = vpop.f32.mrf.mxu0
    %v247 = vadd.f32 %v222, %v246
    %248 = vmatmul.f32.gmra.mxu0 %v227
    %v249 = vpop.f32.mrf.mxu0
    %v250 = vadd.f32 %v222, %v249
    %251 = vdwg.mxu0
    %254 = vrot.lane.b32.xlu0 %v247, 120
    %v255 = vpop.permute.xlu0 %254
    %256 = vrot.lane.b32.xlu0 %v250, 120
    %v257 = vpop.permute.xlu0 %256
    %258 = vrot.lane.b32.xlu0 %v247, 112
    %v259 = vpop.permute.xlu0 %258
    %260 = vrot.lane.b32.xlu0 %v250, 112
    %v261 = vpop.permute.xlu0 %260
    %262 = vrot.lane.b32.xlu0 %v247, 104
    %v263 = vpop.permute.xlu0 %262
    %264 = vrot.lane.b32.xlu0 %v250, 104
    %v265 = vpop.permute.xlu0 %264
    %266 = vrot.lane.b32.xlu0 %v247, 96
    %v267 = vpop.permute.xlu0 %266
    %vm268 = vcmask 64512
    %v269 = vsel %vm268, %v247, 0
    %v271 = vsel %vm268, %v267, 0
    %273 = vmatpush.xpose.msra.mxu0 0.0
    %274 = vmatpush.xpose.msra.mxu0 0.0
    %275 = vmatpush.xpose.msra.mxu0 0.0
    %276 = vmatpush.xpose.msra.mxu0 0.0
    %277 = vmatpush.xpose.msra.mxu0 0.0
    %278 = vmatpush.xpose.msra.mxu0 0.0
    %279 = vmatpush.xpose.msra.mxu0 0.0
    %280 = vmatpush.xpose.msra.mxu0 0.0
    %281 = vmatpush.xpose.msra.mxu0 0.0
    %282 = vmatpush.xpose.msra.mxu0 0.0
    %283 = vmatpush.xpose.msra.mxu0 0.0
    %284 = vmatpush.xpose.msra.mxu0 0.0
    %285 = vmatpush.xpose.msra.mxu0 0.0
    %286 = vmatpush.xpose.msra.mxu0 0.0
    %287 = vmatpush.xpose.msra.mxu0 0.0
    %288 = vmatpush.xpose.msra.mxu0 %v271
    %289 = vmatmul.f32.gmra.mxu0 %v269
    %v290 = vpop.f32.mrf.mxu0
    %v291 = vadd.f32 0.0, %v290
    %292 = vdwg.mxu0
    %293 = vrot.lane.b32.xlu0 %v250, 96
    %v294 = vpop.permute.xlu0 %293
    %v295 = vsel %vm268, %v250, 0
    %v297 = vsel %vm268, %v294, 0
    %299 = vmatpush.xpose.msra.mxu0 0.0
    %300 = vmatpush.xpose.msra.mxu0 0.0
    %301 = vmatpush.xpose.msra.mxu0 0.0
    %302 = vmatpush.xpose.msra.mxu0 0.0
    %303 = vmatpush.xpose.msra.mxu0 0.0
    %304 = vmatpush.xpose.msra.mxu0 0.0
    %305 = vmatpush.xpose.msra.mxu0 0.0
    %306 = vmatpush.xpose.msra.mxu0 0.0
    %307 = vmatpush.xpose.msra.mxu0 0.0
    %308 = vmatpush.xpose.msra.mxu0 0.0
    %309 = vmatpush.xpose.msra.mxu0 0.0
    %310 = vmatpush.xpose.msra.mxu0 0.0
    %311 = vmatpush.xpose.msra.mxu0 0.0
    %312 = vmatpush.xpose.msra.mxu0 0.0
    %313 = vmatpush.xpose.msra.mxu0 0.0
    %314 = vmatpush.xpose.msra.mxu0 %v297
    %315 = vmatmul.f32.gmra.mxu0 %v295
    %v316 = vpop.f32.mrf.mxu0
    %v317 = vadd.f32 0.0, %v316
    %318 = vdwg.mxu0
    %319 = vrot.lane.b32.xlu0 %v255, 96
    %v320 = vpop.permute.xlu0 %319
    %v321 = vsel %vm268, %v255, 0
    %v323 = vsel %vm268, %v320, 0
    %325 = vmatpush.xpose.msra.mxu0 0.0
    %326 = vmatpush.xpose.msra.mxu0 0.0
    %327 = vmatpush.xpose.msra.mxu0 0.0
    %328 = vmatpush.xpose.msra.mxu0 0.0
    %329 = vmatpush.xpose.msra.mxu0 0.0
    %330 = vmatpush.xpose.msra.mxu0 0.0
    %331 = vmatpush.xpose.msra.mxu0 0.0
    %332 = vmatpush.xpose.msra.mxu0 0.0
    %333 = vmatpush.xpose.msra.mxu0 0.0
    %334 = vmatpush.xpose.msra.mxu0 0.0
    %335 = vmatpush.xpose.msra.mxu0 0.0
    %336 = vmatpush.xpose.msra.mxu0 0.0
    %337 = vmatpush.xpose.msra.mxu0 0.0
    %338 = vmatpush.xpose.msra.mxu0 0.0
    %339 = vmatpush.xpose.msra.mxu0 0.0
    %340 = vmatpush.xpose.msra.mxu0 %v323
    %341 = vmatmul.f32.gmra.mxu0 %v321
    %v342 = vpop.f32.mrf.mxu0
    %v343 = vadd.f32 0.0, %v342
    %344 = vdwg.mxu0
    %345 = vrot.lane.b32.xlu0 %v257, 96
    %v346 = vpop.permute.xlu0 %345
    %v347 = vsel %vm268, %v257, 0
    %v349 = vsel %vm268, %v346, 0
    %351 = vmatpush.xpose.msra.mxu0 0.0
    %352 = vmatpush.xpose.msra.mxu0 0.0
    %353 = vmatpush.xpose.msra.mxu0 0.0
    %354 = vmatpush.xpose.msra.mxu0 0.0
    %355 = vmatpush.xpose.msra.mxu0 0.0
    %356 = vmatpush.xpose.msra.mxu0 0.0
    %357 = vmatpush.xpose.msra.mxu0 0.0
    %358 = vmatpush.xpose.msra.mxu0 0.0
    %359 = vmatpush.xpose.msra.mxu0 0.0
    %360 = vmatpush.xpose.msra.mxu0 0.0
    %361 = vmatpush.xpose.msra.mxu0 0.0
    %362 = vmatpush.xpose.msra.mxu0 0.0
    %363 = vmatpush.xpose.msra.mxu0 0.0
    %364 = vmatpush.xpose.msra.mxu0 0.0
    %365 = vmatpush.xpose.msra.mxu0 0.0
    %366 = vmatpush.xpose.msra.mxu0 %v349
    %367 = vmatmul.f32.gmra.mxu0 %v347
    %v368 = vpop.f32.mrf.mxu0
    %v369 = vadd.f32 0.0, %v368
    %370 = vdwg.mxu0
    %371 = vrot.lane.b32.xlu0 %v259, 96
    %v372 = vpop.permute.xlu0 %371
    %v373 = vsel %vm268, %v259, 0
    %v375 = vsel %vm268, %v372, 0
    %377 = vmatpush.xpose.msra.mxu0 0.0
    %378 = vmatpush.xpose.msra.mxu0 0.0
    %379 = vmatpush.xpose.msra.mxu0 0.0
    %380 = vmatpush.xpose.msra.mxu0 0.0
    %381 = vmatpush.xpose.msra.mxu0 0.0
    %382 = vmatpush.xpose.msra.mxu0 0.0
    %383 = vmatpush.xpose.msra.mxu0 0.0
    %384 = vmatpush.xpose.msra.mxu0 0.0
    %385 = vmatpush.xpose.msra.mxu0 0.0
    %386 = vmatpush.xpose.msra.mxu0 0.0
    %387 = vmatpush.xpose.msra.mxu0 0.0
    %388 = vmatpush.xpose.msra.mxu0 0.0
    %389 = vmatpush.xpose.msra.mxu0 0.0
    %390 = vmatpush.xpose.msra.mxu0 0.0
    %391 = vmatpush.xpose.msra.mxu0 0.0
    %392 = vmatpush.xpose.msra.mxu0 %v375
    %393 = vmatmul.f32.gmra.mxu0 %v373
    %v394 = vpop.f32.mrf.mxu0
    %v395 = vadd.f32 0.0, %v394
    %396 = vdwg.mxu0
    %397 = vrot.lane.b32.xlu0 %v261, 96
    %v398 = vpop.permute.xlu0 %397
    %v399 = vsel %vm268, %v261, 0
    %v401 = vsel %vm268, %v398, 0
    %403 = vmatpush.xpose.msra.mxu0 0.0
    %404 = vmatpush.xpose.msra.mxu0 0.0
    %405 = vmatpush.xpose.msra.mxu0 0.0
    %406 = vmatpush.xpose.msra.mxu0 0.0
    %407 = vmatpush.xpose.msra.mxu0 0.0
    %408 = vmatpush.xpose.msra.mxu0 0.0
    %409 = vmatpush.xpose.msra.mxu0 0.0
    %410 = vmatpush.xpose.msra.mxu0 0.0
    %411 = vmatpush.xpose.msra.mxu0 0.0
    %412 = vmatpush.xpose.msra.mxu0 0.0
    %413 = vmatpush.xpose.msra.mxu0 0.0
    %414 = vmatpush.xpose.msra.mxu0 0.0
    %415 = vmatpush.xpose.msra.mxu0 0.0
    %416 = vmatpush.xpose.msra.mxu0 0.0
    %417 = vmatpush.xpose.msra.mxu0 0.0
    %418 = vmatpush.xpose.msra.mxu0 %v401
    %419 = vmatmul.f32.gmra.mxu0 %v399
    %v420 = vpop.f32.mrf.mxu0
    %v421 = vadd.f32 0.0, %v420
    %422 = vdwg.mxu0
    %423 = vrot.lane.b32.xlu0 %v263, 96
    %v424 = vpop.permute.xlu0 %423
    %v425 = vsel %vm268, %v263, 0
    %v427 = vsel %vm268, %v424, 0
    %429 = vmatpush.xpose.msra.mxu0 0.0
    %430 = vmatpush.xpose.msra.mxu0 0.0
    %431 = vmatpush.xpose.msra.mxu0 0.0
    %432 = vmatpush.xpose.msra.mxu0 0.0
    %433 = vmatpush.xpose.msra.mxu0 0.0
    %434 = vmatpush.xpose.msra.mxu0 0.0
    %435 = vmatpush.xpose.msra.mxu0 0.0
    %436 = vmatpush.xpose.msra.mxu0 0.0
    %437 = vmatpush.xpose.msra.mxu0 0.0
    %438 = vmatpush.xpose.msra.mxu0 0.0
    %439 = vmatpush.xpose.msra.mxu0 0.0
    %440 = vmatpush.xpose.msra.mxu0 0.0
    %441 = vmatpush.xpose.msra.mxu0 0.0
    %442 = vmatpush.xpose.msra.mxu0 0.0
    %443 = vmatpush.xpose.msra.mxu0 0.0
    %444 = vmatpush.xpose.msra.mxu0 %v427
    %445 = vmatmul.f32.gmra.mxu0 %v425
    %v446 = vpop.f32.mrf.mxu0
    %v447 = vadd.f32 0.0, %v446
    %448 = vdwg.mxu0
    %449 = vrot.lane.b32.xlu0 %v265, 96
    %v450 = vpop.permute.xlu0 %449
    %v451 = vsel %vm268, %v265, 0
    %v453 = vsel %vm268, %v450, 0
    %455 = vmatpush.xpose.msra.mxu0 0.0
    %456 = vmatpush.xpose.msra.mxu0 0.0
    %457 = vmatpush.xpose.msra.mxu0 0.0
    %458 = vmatpush.xpose.msra.mxu0 0.0
    %459 = vmatpush.xpose.msra.mxu0 0.0
    %460 = vmatpush.xpose.msra.mxu0 0.0
    %461 = vmatpush.xpose.msra.mxu0 0.0
    %462 = vmatpush.xpose.msra.mxu0 0.0
    %463 = vmatpush.xpose.msra.mxu0 0.0
    %464 = vmatpush.xpose.msra.mxu0 0.0
    %465 = vmatpush.xpose.msra.mxu0 0.0
    %466 = vmatpush.xpose.msra.mxu0 0.0
    %467 = vmatpush.xpose.msra.mxu0 0.0
    %468 = vmatpush.xpose.msra.mxu0 0.0
    %469 = vmatpush.xpose.msra.mxu0 0.0
    %470 = vmatpush.xpose.msra.mxu0 %v453
    %471 = vmatmul.f32.gmra.mxu0 %v451
    %v472 = vpop.f32.mrf.mxu0
    %v473 = vadd.f32 0.0, %v472
    %474 = vdwg.mxu0
    %v475 = vmul.f32 %v291, 0.35355338
    %v476 = vmul.f32 %v317, 0.35355338
    %v477 = vmul.f32 %v343, 0.35355338
    %v478 = vmul.f32 %v369, 0.35355338
    %v479 = vmul.f32 %v395, 0.35355338
    %v480 = vmul.f32 %v421, 0.35355338
    %v481 = vmul.f32 %v447, 0.35355338
    %v482 = vmul.f32 %v473, 0.35355338
    %v485 = vperm.slane %v191, 0
    %v486 = vperm.slane %v192, 0
    %v489 = vadd.f32 %v475, %v485
    %v490 = vadd.f32 %v476, %v486
    %v491 = vadd.f32 %v477, %v485
    %v492 = vadd.f32 %v478, %v486
    %v493 = vadd.f32 %v479, %v485
    %v494 = vadd.f32 %v480, %v486
    %v495 = vadd.f32 %v481, %v485
    %v496 = vadd.f32 %v482, %v486
    %v497 = vsel %vm268, %v489, -inf
    %498 = vmax.xlane.f32.xlu0 %v497
    %v499 = vpop.xlane.xlu0 %498
    %v500 = vsel %vm268, %v490, -inf
    %501 = vmax.xlane.f32.xlu0 %v500
    %v502 = vpop.xlane.xlu0 %501
    %v503 = vsel %vm268, %v491, -inf
    %504 = vmax.xlane.f32.xlu0 %v503
    %v505 = vpop.xlane.xlu0 %504
    %v506 = vsel %vm268, %v492, -inf
    %507 = vmax.xlane.f32.xlu0 %v506
    %v508 = vpop.xlane.xlu0 %507
    %v509 = vsel %vm268, %v493, -inf
    %510 = vmax.xlane.f32.xlu0 %v509
    %v511 = vpop.xlane.xlu0 %510
    %v512 = vsel %vm268, %v494, -inf
    %513 = vmax.xlane.f32.xlu0 %v512
    %v514 = vpop.xlane.xlu0 %513
    %v515 = vsel %vm268, %v495, -inf
    %516 = vmax.xlane.f32.xlu0 %v515
    %v517 = vpop.xlane.xlu0 %516
    %v518 = vsel %vm268, %v496, -inf
    %519 = vmax.xlane.f32.xlu0 %v518
    %v520 = vpop.xlane.xlu0 %519
    %v521 = vsub.f32 %v489, %v499
    %v522 = vsub.f32 %v490, %v502
    %v523 = vsub.f32 %v491, %v505
    %v524 = vsub.f32 %v492, %v508
    %v525 = vsub.f32 %v493, %v511
    %v526 = vsub.f32 %v494, %v514
    %v527 = vsub.f32 %v495, %v517
    %v528 = vsub.f32 %v496, %v520
    %v529 = vmul.f32 %v521, 1.442695
    %v530 = vpow.pop %v529
    %v531 = vmul.f32 %v522, 1.442695
    %v532 = vpow.pop %v531
    %v533 = vmul.f32 %v523, 1.442695
    %v534 = vpow.pop %v533
    %v535 = vmul.f32 %v524, 1.442695
    %v536 = vpow.pop %v535
    %v537 = vmul.f32 %v525, 1.442695
    %v538 = vpow.pop %v537
    %v539 = vmul.f32 %v526, 1.442695
    %v540 = vpow.pop %v539
    %v541 = vmul.f32 %v527, 1.442695
    %v542 = vpow.pop %v541
    %v543 = vmul.f32 %v528, 1.442695
    %v544 = vpow.pop %v543
    %v545 = vsel %vm268, %v530, 0.0
    %546 = vadd.xlane.f32.xlu0 %v545
    %v547 = vpop.xlane.xlu0 %546
    %v548 = vsel %vm268, %v532, 0.0
    %549 = vadd.xlane.f32.xlu0 %v548
    %v550 = vpop.xlane.xlu0 %549
    %v551 = vsel %vm268, %v534, 0.0
    %552 = vadd.xlane.f32.xlu0 %v551
    %v553 = vpop.xlane.xlu0 %552
    %v554 = vsel %vm268, %v536, 0.0
    %555 = vadd.xlane.f32.xlu0 %v554
    %v556 = vpop.xlane.xlu0 %555
    %v557 = vsel %vm268, %v538, 0.0
    %558 = vadd.xlane.f32.xlu0 %v557
    %v559 = vpop.xlane.xlu0 %558
    %v560 = vsel %vm268, %v540, 0.0
    %561 = vadd.xlane.f32.xlu0 %v560
    %v562 = vpop.xlane.xlu0 %561
    %v563 = vsel %vm268, %v542, 0.0
    %564 = vadd.xlane.f32.xlu0 %v563
    %v565 = vpop.xlane.xlu0 %564
    %v566 = vsel %vm268, %v544, 0.0
    %567 = vadd.xlane.f32.xlu0 %v566
    %v568 = vpop.xlane.xlu0 %567
    %v569 = vrcp.pop %v547
    %v570 = vrcp.pop %v550
    %v571 = vrcp.pop %v553
    %v572 = vrcp.pop %v556
    %v573 = vrcp.pop %v559
    %v574 = vrcp.pop %v562
    %v575 = vrcp.pop %v565
    %v576 = vrcp.pop %v568
    %v577 = vmul.f32 %v530, %v569
    %v578 = vmul.f32 %v532, %v570
    %v579 = vmul.f32 %v534, %v571
    %v580 = vmul.f32 %v536, %v572
    %v581 = vmul.f32 %v538, %v573
    %v582 = vmul.f32 %v540, %v574
    %v583 = vmul.f32 %v542, %v575
    %v584 = vmul.f32 %v544, %v576
    %585 = vrot.lane.b32.xlu0 %v247, 64
    %v586 = vpop.permute.xlu0 %585
    %v589 = vsel %vm268, %v577, 0
    %591 = vmatpush.msra.mxu0 0.0
    %592 = vmatpush.msra.mxu0 0.0
    %593 = vmatpush.msra.mxu0 0.0
    %594 = vmatpush.msra.mxu0 0.0
    %595 = vmatpush.msra.mxu0 0.0
    %596 = vmatpush.msra.mxu0 0.0
    %597 = vmatpush.msra.mxu0 0.0
    %598 = vmatpush.msra.mxu0 0.0
    %599 = vmatpush.msra.mxu0 0.0
    %600 = vmatpush.msra.mxu0 0.0
    %601 = vmatpush.msra.mxu0 0.0
    %602 = vmatpush.msra.mxu0 0.0
    %603 = vmatpush.msra.mxu0 0.0
    %604 = vmatpush.msra.mxu0 0.0
    %605 = vmatpush.msra.mxu0 0.0
    %606 = vmatpush.msra.mxu0 %v586
    %607 = vmatmul.f32.gmra.mxu0 %v589
    %v608 = vpop.f32.mrf.mxu0
    %v609 = vadd.f32 0.0, %v608
    %610 = vdwg.mxu0
    %611 = vrot.lane.b32.xlu0 %v250, 64
    %v612 = vpop.permute.xlu0 %611
    %v615 = vsel %vm268, %v578, 0
    %617 = vmatpush.msra.mxu0 0.0
    %618 = vmatpush.msra.mxu0 0.0
    %619 = vmatpush.msra.mxu0 0.0
    %620 = vmatpush.msra.mxu0 0.0
    %621 = vmatpush.msra.mxu0 0.0
    %622 = vmatpush.msra.mxu0 0.0
    %623 = vmatpush.msra.mxu0 0.0
    %624 = vmatpush.msra.mxu0 0.0
    %625 = vmatpush.msra.mxu0 0.0
    %626 = vmatpush.msra.mxu0 0.0
    %627 = vmatpush.msra.mxu0 0.0
    %628 = vmatpush.msra.mxu0 0.0
    %629 = vmatpush.msra.mxu0 0.0
    %630 = vmatpush.msra.mxu0 0.0
    %631 = vmatpush.msra.mxu0 0.0
    %632 = vmatpush.msra.mxu0 %v612
    %633 = vmatmul.f32.gmra.mxu0 %v615
    %v634 = vpop.f32.mrf.mxu0
    %v635 = vadd.f32 0.0, %v634
    %636 = vdwg.mxu0
    %637 = vrot.lane.b32.xlu0 %v255, 64
    %v638 = vpop.permute.xlu0 %637
    %v641 = vsel %vm268, %v579, 0
    %643 = vmatpush.msra.mxu0 0.0
    %644 = vmatpush.msra.mxu0 0.0
    %645 = vmatpush.msra.mxu0 0.0
    %646 = vmatpush.msra.mxu0 0.0
    %647 = vmatpush.msra.mxu0 0.0
    %648 = vmatpush.msra.mxu0 0.0
    %649 = vmatpush.msra.mxu0 0.0
    %650 = vmatpush.msra.mxu0 0.0
    %651 = vmatpush.msra.mxu0 0.0
    %652 = vmatpush.msra.mxu0 0.0
    %653 = vmatpush.msra.mxu0 0.0
    %654 = vmatpush.msra.mxu0 0.0
    %655 = vmatpush.msra.mxu0 0.0
    %656 = vmatpush.msra.mxu0 0.0
    %657 = vmatpush.msra.mxu0 0.0
    %658 = vmatpush.msra.mxu0 %v638
    %659 = vmatmul.f32.gmra.mxu0 %v641
    %v660 = vpop.f32.mrf.mxu0
    %v661 = vadd.f32 0.0, %v660
    %662 = vdwg.mxu0
    %663 = vrot.lane.b32.xlu0 %v257, 64
    %v664 = vpop.permute.xlu0 %663
    %v667 = vsel %vm268, %v580, 0
    %669 = vmatpush.msra.mxu0 0.0
    %670 = vmatpush.msra.mxu0 0.0
    %671 = vmatpush.msra.mxu0 0.0
    %672 = vmatpush.msra.mxu0 0.0
    %673 = vmatpush.msra.mxu0 0.0
    %674 = vmatpush.msra.mxu0 0.0
    %675 = vmatpush.msra.mxu0 0.0
    %676 = vmatpush.msra.mxu0 0.0
    %677 = vmatpush.msra.mxu0 0.0
    %678 = vmatpush.msra.mxu0 0.0
    %679 = vmatpush.msra.mxu0 0.0
    %680 = vmatpush.msra.mxu0 0.0
    %681 = vmatpush.msra.mxu0 0.0
    %682 = vmatpush.msra.mxu0 0.0
    %683 = vmatpush.msra.mxu0 0.0
    %684 = vmatpush.msra.mxu0 %v664
    %685 = vmatmul.f32.gmra.mxu0 %v667
    %v686 = vpop.f32.mrf.mxu0
    %v687 = vadd.f32 0.0, %v686
    %688 = vdwg.mxu0
    %689 = vrot.lane.b32.xlu0 %v259, 64
    %v690 = vpop.permute.xlu0 %689
    %v693 = vsel %vm268, %v581, 0
    %695 = vmatpush.msra.mxu0 0.0
    %696 = vmatpush.msra.mxu0 0.0
    %697 = vmatpush.msra.mxu0 0.0
    %698 = vmatpush.msra.mxu0 0.0
    %699 = vmatpush.msra.mxu0 0.0
    %700 = vmatpush.msra.mxu0 0.0
    %701 = vmatpush.msra.mxu0 0.0
    %702 = vmatpush.msra.mxu0 0.0
    %703 = vmatpush.msra.mxu0 0.0
    %704 = vmatpush.msra.mxu0 0.0
    %705 = vmatpush.msra.mxu0 0.0
    %706 = vmatpush.msra.mxu0 0.0
    %707 = vmatpush.msra.mxu0 0.0
    %708 = vmatpush.msra.mxu0 0.0
    %709 = vmatpush.msra.mxu0 0.0
    %710 = vmatpush.msra.mxu0 %v690
    %711 = vmatmul.f32.gmra.mxu0 %v693
    %v712 = vpop.f32.mrf.mxu0
    %v713 = vadd.f32 0.0, %v712
    %714 = vdwg.mxu0
    %715 = vrot.lane.b32.xlu0 %v261, 64
    %v716 = vpop.permute.xlu0 %715
    %v719 = vsel %vm268, %v582, 0
    %721 = vmatpush.msra.mxu0 0.0
    %722 = vmatpush.msra.mxu0 0.0
    %723 = vmatpush.msra.mxu0 0.0
    %724 = vmatpush.msra.mxu0 0.0
    %725 = vmatpush.msra.mxu0 0.0
    %726 = vmatpush.msra.mxu0 0.0
    %727 = vmatpush.msra.mxu0 0.0
    %728 = vmatpush.msra.mxu0 0.0
    %729 = vmatpush.msra.mxu0 0.0
    %730 = vmatpush.msra.mxu0 0.0
    %731 = vmatpush.msra.mxu0 0.0
    %732 = vmatpush.msra.mxu0 0.0
    %733 = vmatpush.msra.mxu0 0.0
    %734 = vmatpush.msra.mxu0 0.0
    %735 = vmatpush.msra.mxu0 0.0
    %736 = vmatpush.msra.mxu0 %v716
    %737 = vmatmul.f32.gmra.mxu0 %v719
    %v738 = vpop.f32.mrf.mxu0
    %v739 = vadd.f32 0.0, %v738
    %740 = vdwg.mxu0
    %741 = vrot.lane.b32.xlu0 %v263, 64
    %v742 = vpop.permute.xlu0 %741
    %v745 = vsel %vm268, %v583, 0
    %747 = vmatpush.msra.mxu0 0.0
    %748 = vmatpush.msra.mxu0 0.0
    %749 = vmatpush.msra.mxu0 0.0
    %750 = vmatpush.msra.mxu0 0.0
    %751 = vmatpush.msra.mxu0 0.0
    %752 = vmatpush.msra.mxu0 0.0
    %753 = vmatpush.msra.mxu0 0.0
    %754 = vmatpush.msra.mxu0 0.0
    %755 = vmatpush.msra.mxu0 0.0
    %756 = vmatpush.msra.mxu0 0.0
    %757 = vmatpush.msra.mxu0 0.0
    %758 = vmatpush.msra.mxu0 0.0
    %759 = vmatpush.msra.mxu0 0.0
    %760 = vmatpush.msra.mxu0 0.0
    %761 = vmatpush.msra.mxu0 0.0
    %762 = vmatpush.msra.mxu0 %v742
    %763 = vmatmul.f32.gmra.mxu0 %v745
    %v764 = vpop.f32.mrf.mxu0
    %v765 = vadd.f32 0.0, %v764
    %766 = vdwg.mxu0
    %767 = vrot.lane.b32.xlu0 %v265, 64
    %v768 = vpop.permute.xlu0 %767
    %v771 = vsel %vm268, %v584, 0
    %773 = vmatpush.msra.mxu0 0.0
    %774 = vmatpush.msra.mxu0 0.0
    %775 = vmatpush.msra.mxu0 0.0
    %776 = vmatpush.msra.mxu0 0.0
    %777 = vmatpush.msra.mxu0 0.0
    %778 = vmatpush.msra.mxu0 0.0
    %779 = vmatpush.msra.mxu0 0.0
    %780 = vmatpush.msra.mxu0 0.0
    %781 = vmatpush.msra.mxu0 0.0
    %782 = vmatpush.msra.mxu0 0.0
    %783 = vmatpush.msra.mxu0 0.0
    %784 = vmatpush.msra.mxu0 0.0
    %785 = vmatpush.msra.mxu0 0.0
    %786 = vmatpush.msra.mxu0 0.0
    %787 = vmatpush.msra.mxu0 0.0
    %788 = vmatpush.msra.mxu0 %v768
    %789 = vmatmul.f32.gmra.mxu0 %v771
    %v790 = vpop.f32.mrf.mxu0
    %v791 = vadd.f32 0.0, %v790
    %792 = vdwg.mxu0
    %795 = vrot.lane.b32.xlu0 %v661, 8
    %v796 = vpop.permute.xlu0 %795
    %797 = vrot.lane.b32.xlu0 %v687, 8
    %v798 = vpop.permute.xlu0 %797
    %803 = vrot.lane.b32.xlu0 %v713, 16
    %v804 = vpop.permute.xlu0 %803
    %805 = vrot.lane.b32.xlu0 %v739, 16
    %v806 = vpop.permute.xlu0 %805
    %811 = vrot.lane.b32.xlu0 %v765, 24
    %v812 = vpop.permute.xlu0 %811
    %813 = vrot.lane.b32.xlu0 %v791, 24
    %v814 = vpop.permute.xlu0 %813
    %v817 = vsel %vm268, %v609, %v796
    %v818 = vsel %vm268, %v635, %v798
    %vm819 = vcmask 130048
    %v820 = vsel %vm819, %v817, %v804
    %v821 = vsel %vm819, %v818, %v806
    %vm822 = vcmask 195584
    %v823 = vsel %vm822, %v820, %v812
    %v824 = vsel %vm822, %v821, %v814
    %v825 = vld [vmem:[#allocation7 + $0x3] sm:$0x1]
    %v826 = vperm.slane %v825, 0
    %v828 = vsel %vm127, %v823, 0
    %v831 = vsel %vm127, %v824, 0
    %833 = vmatpush.msra.mxu0 0.0
    %834 = vmatpush.msra.mxu0 0.0
    %835 = vmatpush.msra.mxu0 0.0
    %836 = vmatpush.msra.mxu0 0.0
    %837 = vmatpush.msra.mxu0 0.0
    %838 = vmatpush.msra.mxu0 0.0
    %839 = vmatpush.msra.mxu0 0.0
    %840 = vmatpush.msra.mxu0 0.0
    %841 = vmatpush.msra.mxu0 0.0
    %842 = vmatpush.msra.mxu0 0.0
    %843 = vmatpush.msra.mxu0 0.0
    %844 = vmatpush.msra.mxu0 0.0
    %845 = vmatpush.msra.mxu0 %v204
    %846 = vmatpush.msra.mxu0 %v203
    %847 = vmatpush.msra.mxu0 %v202
    %848 = vmatpush.msra.mxu0 %v201
    %849 = vmatmul.f32.gmra.mxu0 %v828
    %v850 = vpop.f32.mrf.mxu0
    %v851 = vadd.f32 %v826, %v850
    %852 = vmatmul.f32.gmra.mxu0 %v831
    %v853 = vpop.f32.mrf.mxu0
    %v854 = vadd.f32 %v826, %v853
    %855 = vdwg.mxu0
    %v856 = vadd.f32 %v183, %v851
    %v857 = vadd.f32 %v184, %v854
    %v858 = vld [vmem:[#allocation7 + $0x4] sm:$0x1]
    %v859 = vld [vmem:[#allocation7 + $0x5] sm:$0x1]
    %v860 = vsel %vm127, %v856, 0.0
    %861 = vadd.xlane.f32.xlu0 %v860
    %v862 = vpop.xlane.xlu0 %861
    %v863 = vsel %vm127, %v857, 0.0
    %864 = vadd.xlane.f32.xlu0 %v863
    %v865 = vpop.xlane.xlu0 %864
    %v866 = vmul.f32 %v862, %v140
    %v867 = vmul.f32 %v865, %v140
    %v868 = vsub.f32 %v856, %v866
    %v869 = vsub.f32 %v857, %v867
    %v870 = vmul.f32 %v868, %v868
    %v871 = vmul.f32 %v869, %v869
    %v872 = vsel %vm127, %v870, 0.0
    %873 = vadd.xlane.f32.xlu0 %v872
    %v874 = vpop.xlane.xlu0 %873
    %v875 = vsel %vm127, %v871, 0.0
    %876 = vadd.xlane.f32.xlu0 %v875
    %v877 = vpop.xlane.xlu0 %876
    %v878 = vmul.f32 %v874, %v140
    %v879 = vmul.f32 %v877, %v140
    %v880 = vadd.f32 %v878, 1e-12
    %v881 = vadd.f32 %v879, 1e-12
    %v882 = vrsqrt.pop %v880
    %v883 = vmul.f32 %v882, %v880
    %v884 = vmul.f32 %v883, %v882
    %v885 = vmul.f32 0.5, %v884
    %v886 = vsub.f32 1.5, %v885
    %v887 = vmul.f32 %v882, %v886
    %vm888 = vweird.f32 %v880
    %vm889 = vweird.f32 %v882
    %vm890 = vmor %vm888, %vm889
    %v891 = vsel %vm890, %v882, %v887
    %v892 = vrsqrt.pop %v881
    %v893 = vmul.f32 %v892, %v881
    %v894 = vmul.f32 %v893, %v892
    %v895 = vmul.f32 0.5, %v894
    %v896 = vsub.f32 1.5, %v895
    %v897 = vmul.f32 %v892, %v896
    %vm898 = vweird.f32 %v881
    %vm899 = vweird.f32 %v892
    %vm900 = vmor %vm898, %vm899
    %v901 = vsel %vm900, %v892, %v897
    %v902 = vmul.f32 %v868, %v891
    %v903 = vmul.f32 %v869, %v901
    %v904 = vperm.slane %v858, 0
    %v905 = vmul.f32 %v902, %v904
    %v906 = vmul.f32 %v903, %v904
    %v907 = vperm.slane %v859, 0
    %v908 = vadd.f32 %v905, %v907
    %v909 = vadd.f32 %v906, %v907
    %v910 = vld [vmem:[#allocation7 + $0x6] sm:$0x1]
    %v911 = vperm.slane %v910, 0
    %v913 = vsel %vm127, %v908, 0
    %v916 = vsel %vm127, %v909, 0
    %918 = vmatpush.msra.mxu0 0.0
    %919 = vmatpush.msra.mxu0 0.0
    %920 = vmatpush.msra.mxu0 0.0
    %921 = vmatpush.msra.mxu0 0.0
    %922 = vmatpush.msra.mxu0 0.0
    %923 = vmatpush.msra.mxu0 0.0
    %924 = vmatpush.msra.mxu0 0.0
    %925 = vmatpush.msra.mxu0 0.0
    %926 = vmatpush.msra.mxu0 0.0
    %927 = vmatpush.msra.mxu0 0.0
    %928 = vmatpush.msra.mxu0 0.0
    %929 = vmatpush.msra.mxu0 0.0
    %930 = vmatpush.msra.mxu0 %v200
    %931 = vmatpush.msra.mxu0 %v199
    %932 = vmatpush.msra.mxu0 %v198
    %933 = vmatpush.msra.mxu0 %v197
    %934 = vmatmul.f32.gmra.mxu0 %v913
    %v935 = vpop.f32.mrf.mxu0
    %v936 = vadd.f32 %v911, %v935
    %937 = vmatmul.f32.gmra.mxu0 %v916
    %v938 = vpop.f32.mrf.mxu0
    %v939 = vadd.f32 %v911, %v938
    %940 = vdwg.mxu0
    %v941 = vmul.f32 %v936, %v936
    %v942 = vmul.f32 %v939, %v939
    %v943 = vmul.f32 %v936, %v941
    %v944 = vmul.f32 %v939, %v942
    %v945 = vmul.f32 %v943, 0.044715
    %v946 = vmul.f32 %v944, 0.044715
    %v947 = vadd.f32 %v936, %v945
    %v948 = vadd.f32 %v939, %v946
    %v949 = vmul.f32 %v947, 0.7978846
    %v950 = vmul.f32 %v948, 0.7978846
    %v951 = vtanh.pop %v949
    %v952 = vtanh.pop %v950
    %v953 = vadd.f32 %v951, 1.0
    %v954 = vadd.f32 %v952, 1.0
    %v955 = vmul.f32 %v953, 0.5
    %v956 = vmul.f32 %v954, 0.5
    %v957 = vmul.f32 %v936, %v955
    %v958 = vmul.f32 %v939, %v956
    %v959 = vld [vmem:[#allocation7 + $0x7] sm:$0x1]
    %v960 = vperm.slane %v959, 0
    %961 = vmatpush.msra.mxu0 %v220
    %962 = vmatpush.msra.mxu0 %v219
    %963 = vmatpush.msra.mxu0 %v218
    %964 = vmatpush.msra.mxu0 %v217
    %965 = vmatpush.msra.mxu0 %v216
    %966 = vmatpush.msra.mxu0 %v215
    %967 = vmatpush.msra.mxu0 %v214
    %968 = vmatpush.msra.mxu0 %v213
    %969 = vmatpush.msra.mxu0 %v212
    %970 = vmatpush.msra.mxu0 %v211
    %971 = vmatpush.msra.mxu0 %v210
    %972 = vmatpush.msra.mxu0 %v209
    %973 = vmatpush.msra.mxu0 %v208
    %974 = vmatpush.msra.mxu0 %v207
    %975 = vmatpush.msra.mxu0 %v206
    %976 = vmatpush.msra.mxu0 %v205
    %977 = vmatmul.f32.gmra.mxu0 %v957
    %v978 = vpop.f32.mrf.mxu0
    %v979 = vadd.f32 %v960, %v978
    %980 = vmatmul.f32.gmra.mxu0 %v958
    %v981 = vpop.f32.mrf.mxu0
    %v982 = vadd.f32 %v960, %v981
    %983 = vdwg.mxu0
    %v984 = vadd.f32 %v908, %v979
    %v985 = vadd.f32 %v909, %v982
    %v986 = vld [vmem:[#allocation7 + $0x8] sm:$0x1]
    %v987 = vld [vmem:[#allocation7 + $0x9] sm:$0x1]
    %v988 = vsel %vm127, %v984, 0.0
    %989 = vadd.xlane.f32.xlu0 %v988
    %v990 = vpop.xlane.xlu0 %989
    %v991 = vsel %vm127, %v985, 0.0
    %992 = vadd.xlane.f32.xlu0 %v991
    %v993 = vpop.xlane.xlu0 %992
    %v994 = vmul.f32 %v990, %v140
    %v995 = vmul.f32 %v993, %v140
    %v996 = vsub.f32 %v984, %v994
    %v997 = vsub.f32 %v985, %v995
    %v998 = vmul.f32 %v996, %v996
    %v999 = vmul.f32 %v997, %v997
    %v1000 = vsel %vm127, %v998, 0.0
    %1001 = vadd.xlane.f32.xlu0 %v1000
    %v1002 = vpop.xlane.xlu0 %1001
    %v1003 = vsel %vm127, %v999, 0.0
    %1004 = vadd.xlane.f32.xlu0 %v1003
    %v1005 = vpop.xlane.xlu0 %1004
    %v1006 = vmul.f32 %v1002, %v140
    %v1007 = vmul.f32 %v1005, %v140
    %v1008 = vadd.f32 %v1006, 1e-12
    %v1009 = vadd.f32 %v1007, 1e-12
    %v1010 = vrsqrt.pop %v1008
    %v1011 = vmul.f32 %v1010, %v1008
    %v1012 = vmul.f32 %v1011, %v1010
    %v1013 = vmul.f32 0.5, %v1012
    %v1014 = vsub.f32 1.5, %v1013
    %v1015 = vmul.f32 %v1010, %v1014
    %vm1016 = vweird.f32 %v1008
    %vm1017 = vweird.f32 %v1010
    %vm1018 = vmor %vm1016, %vm1017
    %v1019 = vsel %vm1018, %v1010, %v1015
    %v1020 = vrsqrt.pop %v1009
    %v1021 = vmul.f32 %v1020, %v1009
    %v1022 = vmul.f32 %v1021, %v1020
    %v1023 = vmul.f32 0.5, %v1022
    %v1024 = vsub.f32 1.5, %v1023
    %v1025 = vmul.f32 %v1020, %v1024
    %vm1026 = vweird.f32 %v1009
    %vm1027 = vweird.f32 %v1020
    %vm1028 = vmor %vm1026, %vm1027
    %v1029 = vsel %vm1028, %v1020, %v1025
    %v1030 = vmul.f32 %v996, %v1019
    %v1031 = vmul.f32 %v997, %v1029
    %v1032 = vperm.slane %v986, 0
    %v1033 = vmul.f32 %v1030, %v1032
    %v1034 = vmul.f32 %v1031, %v1032
    %v1035 = vperm.slane %v987, 0
    %v1036 = vadd.f32 %v1033, %v1035
    %v1037 = vadd.f32 %v1034, %v1035
    %v1038 = vld [vmem:[#allocation5 + $0x40] sm:$0xff]
    %v1039 = vld [vmem:[#allocation5 + $0x48] sm:$0xff]
    %v1040 = vld [vmem:[#allocation5 + $0x50] sm:$0xff]
    %v1041 = vld [vmem:[#allocation5 + $0x58] sm:$0xff]
    %v1042 = vld [vmem:[#allocation5 + $0x60] sm:$0xff]
    %v1043 = vld [vmem:[#allocation5 + $0x68] sm:$0xff]
    %v1044 = vld [vmem:[#allocation5 + $0x70] sm:$0xff]
    %v1045 = vld [vmem:[#allocation5 + $0x78] sm:$0xff]
    %v1046 = vld [vmem:[#allocation2 + $0xf0] sm:$0xff]
    %v1047 = vld [vmem:[#allocation2 + $0xf8] sm:$0xff]
    %v1048 = vld [vmem:[#allocation2 + $0x100] sm:$0xff]
    %v1049 = vld [vmem:[#allocation2 + $0x108] sm:$0xff]
    %v1050 = vld [vmem:[#allocation2 + $0x110] sm:$0xff]
    %v1051 = vld [vmem:[#allocation2 + $0x118] sm:$0xff]
    %v1052 = vld [vmem:[#allocation2 + $0x120] sm:$0xff]
    %v1053 = vld [vmem:[#allocation2 + $0x128] sm:$0xff]
    %v1054 = vld [vmem:[#allocation2 + $0x130] sm:$0xff]
    %v1055 = vld [vmem:[#allocation2 + $0x138] sm:$0xff]
    %v1056 = vld [vmem:[#allocation2 + $0x140] sm:$0xff]
    %v1057 = vld [vmem:[#allocation2 + $0x148] sm:$0xff]
    %v1058 = vld [vmem:[#allocation2 + $0x150] sm:$0xff]
    %v1059 = vld [vmem:[#allocation2 + $0x158] sm:$0xff]
    %v1060 = vld [vmem:[#allocation2 + $0x160] sm:$0xff]
    %v1061 = vld [vmem:[#allocation2 + $0x168] sm:$0xff]
    %v1062 = vld [vmem:[#allocation2 + $0x170] sm:$0xff]
    %v1063 = vld [vmem:[#allocation2 + $0x178] sm:$0xff]
    %v1064 = vld [vmem:[#allocation2 + $0x180] sm:$0xff]
    %v1065 = vld [vmem:[#allocation2 + $0x188] sm:$0xff]
    %v1066 = vld [vmem:[#allocation7 + $0xa] sm:$0x1]
    %v1067 = vperm.slane %v1066, 0
    %v1069 = vsel %vm127, %v1036, 0
    %v1072 = vsel %vm127, %v1037, 0
    %1074 = vmatpush.msra.mxu0 0.0
    %1075 = vmatpush.msra.mxu0 0.0
    %1076 = vmatpush.msra.mxu0 0.0
    %1077 = vmatpush.msra.mxu0 0.0
    %1078 = vmatpush.msra.mxu0 0.0
    %1079 = vmatpush.msra.mxu0 0.0
    %1080 = vmatpush.msra.mxu0 0.0
    %1081 = vmatpush.msra.mxu0 0.0
    %1082 = vmatpush.msra.mxu0 0.0
    %1083 = vmatpush.msra.mxu0 0.0
    %1084 = vmatpush.msra.mxu0 0.0
    %1085 = vmatpush.msra.mxu0 0.0
    %1086 = vmatpush.msra.mxu0 %v1041
    %1087 = vmatpush.msra.mxu0 %v1040
    %1088 = vmatpush.msra.mxu0 %v1039
    %1089 = vmatpush.msra.mxu0 %v1038
    %1090 = vmatmul.f32.gmra.mxu0 %v1069
    %v1091 = vpop.f32.mrf.mxu0
    %v1092 = vadd.f32 %v1067, %v1091
    %1093 = vmatmul.f32.gmra.mxu0 %v1072
    %v1094 = vpop.f32.mrf.mxu0
    %v1095 = vadd.f32 %v1067, %v1094
    %1096 = vdwg.mxu0
    %1099 = vrot.lane.b32.xlu0 %v1092, 120
    %v1100 = vpop.permute.xlu0 %1099
    %1101 = vrot.lane.b32.xlu0 %v1095, 120
    %v1102 = vpop.permute.xlu0 %1101
    %1103 = vrot.lane.b32.xlu0 %v1092, 112
    %v1104 = vpop.permute.xlu0 %1103
    %1105 = vrot.lane.b32.xlu0 %v1095, 112
    %v1106 = vpop.permute.xlu0 %1105
    %1107 = vrot.lane.b32.xlu0 %v1092, 104
    %v1108 = vpop.permute.xlu0 %1107
    %1109 = vrot.lane.b32.xlu0 %v1095, 104
    %v1110 = vpop.permute.xlu0 %1109
    %1111 = vrot.lane.b32.xlu0 %v1092, 96
    %v1112 = vpop.permute.xlu0 %1111
    %v1113 = vsel %vm268, %v1092, 0
    %v1115 = vsel %vm268, %v1112, 0
    %1117 = vmatpush.xpose.msra.mxu0 0.0
    %1118 = vmatpush.xpose.msra.mxu0 0.0
    %1119 = vmatpush.xpose.msra.mxu0 0.0
    %1120 = vmatpush.xpose.msra.mxu0 0.0
    %1121 = vmatpush.xpose.msra.mxu0 0.0
    %1122 = vmatpush.xpose.msra.mxu0 0.0
    %1123 = vmatpush.xpose.msra.mxu0 0.0
    %1124 = vmatpush.xpose.msra.mxu0 0.0
    %1125 = vmatpush.xpose.msra.mxu0 0.0
    %1126 = vmatpush.xpose.msra.mxu0 0.0
    %1127 = vmatpush.xpose.msra.mxu0 0.0
    %1128 = vmatpush.xpose.msra.mxu0 0.0
    %1129 = vmatpush.xpose.msra.mxu0 0.0
    %1130 = vmatpush.xpose.msra.mxu0 0.0
    %1131 = vmatpush.xpose.msra.mxu0 0.0
    %1132 = vmatpush.xpose.msra.mxu0 %v1115
    %1133 = vmatmul.f32.gmra.mxu0 %v1113
    %v1134 = vpop.f32.mrf.mxu0
    %v1135 = vadd.f32 0.0, %v1134
    %1136 = vdwg.mxu0
    %1137 = vrot.lane.b32.xlu0 %v1095, 96
    %v1138 = vpop.permute.xlu0 %1137
    %v1139 = vsel %vm268, %v1095, 0
    %v1141 = vsel %vm268, %v1138, 0
    %1143 = vmatpush.xpose.msra.mxu0 0.0
    %1144 = vmatpush.xpose.msra.mxu0 0.0
    %1145 = vmatpush.xpose.msra.mxu0 0.0
    %1146 = vmatpush.xpose.msra.mxu0 0.0
    %1147 = vmatpush.xpose.msra.mxu0 0.0
    %1148 = vmatpush.xpose.msra.mxu0 0.0
    %1149 = vmatpush.xpose.msra.mxu0 0.0
    %1150 = vmatpush.xpose.msra.mxu0 0.0
    %1151 = vmatpush.xpose.msra.mxu0 0.0
    %1152 = vmatpush.xpose.msra.mxu0 0.0
    %1153 = vmatpush.xpose.msra.mxu0 0.0
    %1154 = vmatpush.xpose.msra.mxu0 0.0
    %1155 = vmatpush.xpose.msra.mxu0 0.0
    %1156 = vmatpush.xpose.msra.mxu0 0.0
    %1157 = vmatpush.xpose.msra.mxu0 0.0
    %1158 = vmatpush.xpose.msra.mxu0 %v1141
    %1159 = vmatmul.f32.gmra.mxu0 %v1139
    %v1160 = vpop.f32.mrf.mxu0
    %v1161 = vadd.f32 0.0, %v1160
    %1162 = vdwg.mxu0
    %1163 = vrot.lane.b32.xlu0 %v1100, 96
    %v1164 = vpop.permute.xlu0 %1163
    %v1165 = vsel %vm268, %v1100, 0
    %v1167 = vsel %vm268, %v1164, 0
    %1169 = vmatpush.xpose.msra.mxu0 0.0
    %1170 = vmatpush.xpose.msra.mxu0 0.0
    %1171 = vmatpush.xpose.msra.mxu0 0.0
    %1172 = vmatpush.xpose.msra.mxu0 0.0
    %1173 = vmatpush.xpose.msra.mxu0 0.0
    %1174 = vmatpush.xpose.msra.mxu0 0.0
    %1175 = vmatpush.xpose.msra.mxu0 0.0
    %1176 = vmatpush.xpose.msra.mxu0 0.0
    %1177 = vmatpush.xpose.msra.mxu0 0.0
    %1178 = vmatpush.xpose.msra.mxu0 0.0
    %1179 = vmatpush.xpose.msra.mxu0 0.0
    %1180 = vmatpush.xpose.msra.mxu0 0.0
    %1181 = vmatpush.xpose.msra.mxu0 0.0
    %1182 = vmatpush.xpose.msra.mxu0 0.0
    %1183 = vmatpush.xpose.msra.mxu0 0.0
    %1184 = vmatpush.xpose.msra.mxu0 %v1167
    %1185 = vmatmul.f32.gmra.mxu0 %v1165
    %v1186 = vpop.f32.mrf.mxu0
    %v1187 = vadd.f32 0.0, %v1186
    %1188 = vdwg.mxu0
    %1189 = vrot.lane.b32.xlu0 %v1102, 96
    %v1190 = vpop.permute.xlu0 %1189
    %v1191 = vsel %vm268, %v1102, 0
    %v1193 = vsel %vm268, %v1190, 0
    %1195 = vmatpush.xpose.msra.mxu0 0.0
    %1196 = vmatpush.xpose.msra.mxu0 0.0
    %1197 = vmatpush.xpose.msra.mxu0 0.0
    %1198 = vmatpush.xpose.msra.mxu0 0.0
    %1199 = vmatpush.xpose.msra.mxu0 0.0
    %1200 = vmatpush.xpose.msra.mxu0 0.0
    %1201 = vmatpush.xpose.msra.mxu0 0.0
    %1202 = vmatpush.xpose.msra.mxu0 0.0
    %1203 = vmatpush.xpose.msra.mxu0 0.0
    %1204 = vmatpush.xpose.msra.mxu0 0.0
    %1205 = vmatpush.xpose.msra.mxu0 0.0
    %1206 = vmatpush.xpose.msra.mxu0 0.0
    %1207 = vmatpush.xpose.msra.mxu0 0.0
    %1208 = vmatpush.xpose.msra.mxu0 0.0
    %1209 = vmatpush.xpose.msra.mxu0 0.0
    %1210 = vmatpush.xpose.msra.mxu0 %v1193
    %1211 = vmatmul.f32.gmra.mxu0 %v1191
    %v1212 = vpop.f32.mrf.mxu0
    %v1213 = vadd.f32 0.0, %v1212
    %1214 = vdwg.mxu0
    %1215 = vrot.lane.b32.xlu0 %v1104, 96
    %v1216 = vpop.permute.xlu0 %1215
    %v1217 = vsel %vm268, %v1104, 0
    %v1219 = vsel %vm268, %v1216, 0
    %1221 = vmatpush.xpose.msra.mxu0 0.0
    %1222 = vmatpush.xpose.msra.mxu0 0.0
    %1223 = vmatpush.xpose.msra.mxu0 0.0
    %1224 = vmatpush.xpose.msra.mxu0 0.0
    %1225 = vmatpush.xpose.msra.mxu0 0.0
    %1226 = vmatpush.xpose.msra.mxu0 0.0
    %1227 = vmatpush.xpose.msra.mxu0 0.0
    %1228 = vmatpush.xpose.msra.mxu0 0.0
    %1229 = vmatpush.xpose.msra.mxu0 0.0
    %1230 = vmatpush.xpose.msra.mxu0 0.0
    %1231 = vmatpush.xpose.msra.mxu0 0.0
    %1232 = vmatpush.xpose.msra.mxu0 0.0
    %1233 = vmatpush.xpose.msra.mxu0 0.0
    %1234 = vmatpush.xpose.msra.mxu0 0.0
    %1235 = vmatpush.xpose.msra.mxu0 0.0
    %1236 = vmatpush.xpose.msra.mxu0 %v1219
    %1237 = vmatmul.f32.gmra.mxu0 %v1217
    %v1238 = vpop.f32.mrf.mxu0
    %v1239 = vadd.f32 0.0, %v1238
    %1240 = vdwg.mxu0
    %1241 = vrot.lane.b32.xlu0 %v1106, 96
    %v1242 = vpop.permute.xlu0 %1241
    %v1243 = vsel %vm268, %v1106, 0
    %v1245 = vsel %vm268, %v1242, 0
    %1247 = vmatpush.xpose.msra.mxu0 0.0
    %1248 = vmatpush.xpose.msra.mxu0 0.0
    %1249 = vmatpush.xpose.msra.mxu0 0.0
    %1250 = vmatpush.xpose.msra.mxu0 0.0
    %1251 = vmatpush.xpose.msra.mxu0 0.0
    %1252 = vmatpush.xpose.msra.mxu0 0.0
    %1253 = vmatpush.xpose.msra.mxu0 0.0
    %1254 = vmatpush.xpose.msra.mxu0 0.0
    %1255 = vmatpush.xpose.msra.mxu0 0.0
    %1256 = vmatpush.xpose.msra.mxu0 0.0
    %1257 = vmatpush.xpose.msra.mxu0 0.0
    %1258 = vmatpush.xpose.msra.mxu0 0.0
    %1259 = vmatpush.xpose.msra.mxu0 0.0
    %1260 = vmatpush.xpose.msra.mxu0 0.0
    %1261 = vmatpush.xpose.msra.mxu0 0.0
    %1262 = vmatpush.xpose.msra.mxu0 %v1245
    %1263 = vmatmul.f32.gmra.mxu0 %v1243
    %v1264 = vpop.f32.mrf.mxu0
    %v1265 = vadd.f32 0.0, %v1264
    %1266 = vdwg.mxu0
    %1267 = vrot.lane.b32.xlu0 %v1108, 96
    %v1268 = vpop.permute.xlu0 %1267
    %v1269 = vsel %vm268, %v1108, 0
    %v1271 = vsel %vm268, %v1268, 0
    %1273 = vmatpush.xpose.msra.mxu0 0.0
    %1274 = vmatpush.xpose.msra.mxu0 0.0
    %1275 = vmatpush.xpose.msra.mxu0 0.0
    %1276 = vmatpush.xpose.msra.mxu0 0.0
    %1277 = vmatpush.xpose.msra.mxu0 0.0
    %1278 = vmatpush.xpose.msra.mxu0 0.0
    %1279 = vmatpush.xpose.msra.mxu0 0.0
    %1280 = vmatpush.xpose.msra.mxu0 0.0
    %1281 = vmatpush.xpose.msra.mxu0 0.0
    %1282 = vmatpush.xpose.msra.mxu0 0.0
    %1283 = vmatpush.xpose.msra.mxu0 0.0
    %1284 = vmatpush.xpose.msra.mxu0 0.0
    %1285 = vmatpush.xpose.msra.mxu0 0.0
    %1286 = vmatpush.xpose.msra.mxu0 0.0
    %1287 = vmatpush.xpose.msra.mxu0 0.0
    %1288 = vmatpush.xpose.msra.mxu0 %v1271
    %1289 = vmatmul.f32.gmra.mxu0 %v1269
    %v1290 = vpop.f32.mrf.mxu0
    %v1291 = vadd.f32 0.0, %v1290
    %1292 = vdwg.mxu0
    %1293 = vrot.lane.b32.xlu0 %v1110, 96
    %v1294 = vpop.permute.xlu0 %1293
    %v1295 = vsel %vm268, %v1110, 0
    %v1297 = vsel %vm268, %v1294, 0
    %1299 = vmatpush.xpose.msra.mxu0 0.0
    %1300 = vmatpush.xpose.msra.mxu0 0.0
    %1301 = vmatpush.xpose.msra.mxu0 0.0
    %1302 = vmatpush.xpose.msra.mxu0 0.0
    %1303 = vmatpush.xpose.msra.mxu0 0.0
    %1304 = vmatpush.xpose.msra.mxu0 0.0
    %1305 = vmatpush.xpose.msra.mxu0 0.0
    %1306 = vmatpush.xpose.msra.mxu0 0.0
    %1307 = vmatpush.xpose.msra.mxu0 0.0
    %1308 = vmatpush.xpose.msra.mxu0 0.0
    %1309 = vmatpush.xpose.msra.mxu0 0.0
    %1310 = vmatpush.xpose.msra.mxu0 0.0
    %1311 = vmatpush.xpose.msra.mxu0 0.0
    %1312 = vmatpush.xpose.msra.mxu0 0.0
    %1313 = vmatpush.xpose.msra.mxu0 0.0
    %1314 = vmatpush.xpose.msra.mxu0 %v1297
    %1315 = vmatmul.f32.gmra.mxu0 %v1295
    %v1316 = vpop.f32.mrf.mxu0
    %v1317 = vadd.f32 0.0, %v1316
    %1318 = vdwg.mxu0
    %v1319 = vmul.f32 %v1135, 0.35355338
    %v1320 = vmul.f32 %v1161, 0.35355338
    %v1321 = vmul.f32 %v1187, 0.35355338
    %v1322 = vmul.f32 %v1213, 0.35355338
    %v1323 = vmul.f32 %v1239, 0.35355338
    %v1324 = vmul.f32 %v1265, 0.35355338
    %v1325 = vmul.f32 %v1291, 0.35355338
    %v1326 = vmul.f32 %v1317, 0.35355338
    %v1327 = vadd.f32 %v1319, %v485
    %v1328 = vadd.f32 %v1320, %v486
    %v1329 = vadd.f32 %v1321, %v485
    %v1330 = vadd.f32 %v1322, %v486
    %v1331 = vadd.f32 %v1323, %v485
    %v1332 = vadd.f32 %v1324, %v486
    %v1333 = vadd.f32 %v1325, %v485
    %v1334 = vadd.f32 %v1326, %v486
    %v1335 = vsel %vm268, %v1327, -inf
    %1336 = vmax.xlane.f32.xlu0 %v1335
    %v1337 = vpop.xlane.xlu0 %1336
    %v1338 = vsel %vm268, %v1328, -inf
    %1339 = vmax.xlane.f32.xlu0 %v1338
    %v1340 = vpop.xlane.xlu0 %1339
    %v1341 = vsel %vm268, %v1329, -inf
    %1342 = vmax.xlane.f32.xlu0 %v1341
    %v1343 = vpop.xlane.xlu0 %1342
    %v1344 = vsel %vm268, %v1330, -inf
    %1345 = vmax.xlane.f32.xlu0 %v1344
    %v1346 = vpop.xlane.xlu0 %1345
    %v1347 = vsel %vm268, %v1331, -inf
    %1348 = vmax.xlane.f32.xlu0 %v1347
    %v1349 = vpop.xlane.xlu0 %1348
    %v1350 = vsel %vm268, %v1332, -inf
    %1351 = vmax.xlane.f32.xlu0 %v1350
    %v1352 = vpop.xlane.xlu0 %1351
    %v1353 = vsel %vm268, %v1333, -inf
    %1354 = vmax.xlane.f32.xlu0 %v1353
    %v1355 = vpop.xlane.xlu0 %1354
    %v1356 = vsel %vm268, %v1334, -inf
    %1357 = vmax.xlane.f32.xlu0 %v1356
    %v1358 = vpop.xlane.xlu0 %1357
    %v1359 = vsub.f32 %v1327, %v1337
    %v1360 = vsub.f32 %v1328, %v1340
    %v1361 = vsub.f32 %v1329, %v1343
    %v1362 = vsub.f32 %v1330, %v1346
    %v1363 = vsub.f32 %v1331, %v1349
    %v1364 = vsub.f32 %v1332, %v1352
    %v1365 = vsub.f32 %v1333, %v1355
    %v1366 = vsub.f32 %v1334, %v1358
    %v1367 = vmul.f32 %v1359, 1.442695
    %v1368 = vpow.pop %v1367
    %v1369 = vmul.f32 %v1360, 1.442695
    %v1370 = vpow.pop %v1369
    %v1371 = vmul.f32 %v1361, 1.442695
    %v1372 = vpow.pop %v1371
    %v1373 = vmul.f32 %v1362, 1.442695
    %v1374 = vpow.pop %v1373
    %v1375 = vmul.f32 %v1363, 1.442695
    %v1376 = vpow.pop %v1375
    %v1377 = vmul.f32 %v1364, 1.442695
    %v1378 = vpow.pop %v1377
    %v1379 = vmul.f32 %v1365, 1.442695
    %v1380 = vpow.pop %v1379
    %v1381 = vmul.f32 %v1366, 1.442695
    %v1382 = vpow.pop %v1381
    %v1383 = vsel %vm268, %v1368, 0.0
    %1384 = vadd.xlane.f32.xlu0 %v1383
    %v1385 = vpop.xlane.xlu0 %1384
    %v1386 = vsel %vm268, %v1370, 0.0
    %1387 = vadd.xlane.f32.xlu0 %v1386
    %v1388 = vpop.xlane.xlu0 %1387
    %v1389 = vsel %vm268, %v1372, 0.0
    %1390 = vadd.xlane.f32.xlu0 %v1389
    %v1391 = vpop.xlane.xlu0 %1390
    %v1392 = vsel %vm268, %v1374, 0.0
    %1393 = vadd.xlane.f32.xlu0 %v1392
    %v1394 = vpop.xlane.xlu0 %1393
    %v1395 = vsel %vm268, %v1376, 0.0
    %1396 = vadd.xlane.f32.xlu0 %v1395
    %v1397 = vpop.xlane.xlu0 %1396
    %v1398 = vsel %vm268, %v1378, 0.0
    %1399 = vadd.xlane.f32.xlu0 %v1398
    %v1400 = vpop.xlane.xlu0 %1399
    %v1401 = vsel %vm268, %v1380, 0.0
    %1402 = vadd.xlane.f32.xlu0 %v1401
    %v1403 = vpop.xlane.xlu0 %1402
    %v1404 = vsel %vm268, %v1382, 0.0
    %1405 = vadd.xlane.f32.xlu0 %v1404
    %v1406 = vpop.xlane.xlu0 %1405
    %v1407 = vrcp.pop %v1385
    %v1408 = vrcp.pop %v1388
    %v1409 = vrcp.pop %v1391
    %v1410 = vrcp.pop %v1394
    %v1411 = vrcp.pop %v1397
    %v1412 = vrcp.pop %v1400
    %v1413 = vrcp.pop %v1403
    %v1414 = vrcp.pop %v1406
    %v1415 = vmul.f32 %v1368, %v1407
    %v1416 = vmul.f32 %v1370, %v1408
    %v1417 = vmul.f32 %v1372, %v1409
    %v1418 = vmul.f32 %v1374, %v1410
    %v1419 = vmul.f32 %v1376, %v1411
    %v1420 = vmul.f32 %v1378, %v1412
    %v1421 = vmul.f32 %v1380, %v1413
    %v1422 = vmul.f32 %v1382, %v1414
    %1423 = vrot.lane.b32.xlu0 %v1092, 64
    %v1424 = vpop.permute.xlu0 %1423
    %v1427 = vsel %vm268, %v1415, 0
    %1429 = vmatpush.msra.mxu0 0.0
    %1430 = vmatpush.msra.mxu0 0.0
    %1431 = vmatpush.msra.mxu0 0.0
    %1432 = vmatpush.msra.mxu0 0.0
    %1433 = vmatpush.msra.mxu0 0.0
    %1434 = vmatpush.msra.mxu0 0.0
    %1435 = vmatpush.msra.mxu0 0.0
    %1436 = vmatpush.msra.mxu0 0.0
    %1437 = vmatpush.msra.mxu0 0.0
    %1438 = vmatpush.msra.mxu0 0.0
    %1439 = vmatpush.msra.mxu0 0.0
    %1440 = vmatpush.msra.mxu0 0.0
    %1441 = vmatpush.msra.mxu0 0.0
    %1442 = vmatpush.msra.mxu0 0.0
    %1443 = vmatpush.msra.mxu0 0.0
    %1444 = vmatpush.msra.mxu0 %v1424
    %1445 = vmatmul.f32.gmra.mxu0 %v1427
    %v1446 = vpop.f32.mrf.mxu0
    %v1447 = vadd.f32 0.0, %v1446
    %1448 = vdwg.mxu0
    %1449 = vrot.lane.b32.xlu0 %v1095, 64
    %v1450 = vpop.permute.xlu0 %1449
    %v1453 = vsel %vm268, %v1416, 0
    %1455 = vmatpush.msra.mxu0 0.0
    %1456 = vmatpush.msra.mxu0 0.0
    %1457 = vmatpush.msra.mxu0 0.0
    %1458 = vmatpush.msra.mxu0 0.0
    %1459 = vmatpush.msra.mxu0 0.0
    %1460 = vmatpush.msra.mxu0 0.0
    %1461 = vmatpush.msra.mxu0 0.0
    %1462 = vmatpush.msra.mxu0 0.0
    %1463 = vmatpush.msra.mxu0 0.0
    %1464 = vmatpush.msra.mxu0 0.0
    %1465 = vmatpush.msra.mxu0 0.0
    %1466 = vmatpush.msra.mxu0 0.0
    %1467 = vmatpush.msra.mxu0 0.0
    %1468 = vmatpush.msra.mxu0 0.0
    %1469 = vmatpush.msra.mxu0 0.0
    %1470 = vmatpush.msra.mxu0 %v1450
    %1471 = vmatmul.f32.gmra.mxu0 %v1453
    %v1472 = vpop.f32.mrf.mxu0
    %v1473 = vadd.f32 0.0, %v1472
    %1474 = vdwg.mxu0
    %1475 = vrot.lane.b32.xlu0 %v1100, 64
    %v1476 = vpop.permute.xlu0 %1475
    %v1479 = vsel %vm268, %v1417, 0
    %1481 = vmatpush.msra.mxu0 0.0
    %1482 = vmatpush.msra.mxu0 0.0
    %1483 = vmatpush.msra.mxu0 0.0
    %1484 = vmatpush.msra.mxu0 0.0
    %1485 = vmatpush.msra.mxu0 0.0
    %1486 = vmatpush.msra.mxu0 0.0
    %1487 = vmatpush.msra.mxu0 0.0
    %1488 = vmatpush.msra.mxu0 0.0
    %1489 = vmatpush.msra.mxu0 0.0
    %1490 = vmatpush.msra.mxu0 0.0
    %1491 = vmatpush.msra.mxu0 0.0
    %1492 = vmatpush.msra.mxu0 0.0
    %1493 = vmatpush.msra.mxu0 0.0
    %1494 = vmatpush.msra.mxu0 0.0
    %1495 = vmatpush.msra.mxu0 0.0
    %1496 = vmatpush.msra.mxu0 %v1476
    %1497 = vmatmul.f32.gmra.mxu0 %v1479
    %v1498 = vpop.f32.mrf.mxu0
    %v1499 = vadd.f32 0.0, %v1498
    %1500 = vdwg.mxu0
    %1501 = vrot.lane.b32.xlu0 %v1102, 64
    %v1502 = vpop.permute.xlu0 %1501
    %v1505 = vsel %vm268, %v1418, 0
    %1507 = vmatpush.msra.mxu0 0.0
    %1508 = vmatpush.msra.mxu0 0.0
    %1509 = vmatpush.msra.mxu0 0.0
    %1510 = vmatpush.msra.mxu0 0.0
    %1511 = vmatpush.msra.mxu0 0.0
    %1512 = vmatpush.msra.mxu0 0.0
    %1513 = vmatpush.msra.mxu0 0.0
    %1514 = vmatpush.msra.mxu0 0.0
    %1515 = vmatpush.msra.mxu0 0.0
    %1516 = vmatpush.msra.mxu0 0.0
    %1517 = vmatpush.msra.mxu0 0.0
    %1518 = vmatpush.msra.mxu0 0.0
    %1519 = vmatpush.msra.mxu0 0.0
    %1520 = vmatpush.msra.mxu0 0.0
    %1521 = vmatpush.msra.mxu0 0.0
    %1522 = vmatpush.msra.mxu0 %v1502
    %1523 = vmatmul.f32.gmra.mxu0 %v1505
    %v1524 = vpop.f32.mrf.mxu0
    %v1525 = vadd.f32 0.0, %v1524
    %1526 = vdwg.mxu0
    %1527 = vrot.lane.b32.xlu0 %v1104, 64
    %v1528 = vpop.permute.xlu0 %1527
    %v1531 = vsel %vm268, %v1419, 0
    %1533 = vmatpush.msra.mxu0 0.0
    %1534 = vmatpush.msra.mxu0 0.0
    %1535 = vmatpush.msra.mxu0 0.0
    %1536 = vmatpush.msra.mxu0 0.0
    %1537 = vmatpush.msra.mxu0 0.0
    %1538 = vmatpush.msra.mxu0 0.0
    %1539 = vmatpush.msra.mxu0 0.0
    %1540 = vmatpush.msra.mxu0 0.0
    %1541 = vmatpush.msra.mxu0 0.0
    %1542 = vmatpush.msra.mxu0 0.0
    %1543 = vmatpush.msra.mxu0 0.0
    %1544 = vmatpush.msra.mxu0 0.0
    %1545 = vmatpush.msra.mxu0 0.0
    %1546 = vmatpush.msra.mxu0 0.0
    %1547 = vmatpush.msra.mxu0 0.0
    %1548 = vmatpush.msra.mxu0 %v1528
    %1549 = vmatmul.f32.gmra.mxu0 %v1531
    %v1550 = vpop.f32.mrf.mxu0
    %v1551 = vadd.f32 0.0, %v1550
    %1552 = vdwg.mxu0
    %1553 = vrot.lane.b32.xlu0 %v1106, 64
    %v1554 = vpop.permute.xlu0 %1553
    %v1557 = vsel %vm268, %v1420, 0
    %1559 = vmatpush.msra.mxu0 0.0
    %1560 = vmatpush.msra.mxu0 0.0
    %1561 = vmatpush.msra.mxu0 0.0
    %1562 = vmatpush.msra.mxu0 0.0
    %1563 = vmatpush.msra.mxu0 0.0
    %1564 = vmatpush.msra.mxu0 0.0
    %1565 = vmatpush.msra.mxu0 0.0
    %1566 = vmatpush.msra.mxu0 0.0
    %1567 = vmatpush.msra.mxu0 0.0
    %1568 = vmatpush.msra.mxu0 0.0
    %1569 = vmatpush.msra.mxu0 0.0
    %1570 = vmatpush.msra.mxu0 0.0
    %1571 = vmatpush.msra.mxu0 0.0
    %1572 = vmatpush.msra.mxu0 0.0
    %1573 = vmatpush.msra.mxu0 0.0
    %1574 = vmatpush.msra.mxu0 %v1554
    %1575 = vmatmul.f32.gmra.mxu0 %v1557
    %v1576 = vpop.f32.mrf.mxu0
    %v1577 = vadd.f32 0.0, %v1576
    %1578 = vdwg.mxu0
    %1579 = vrot.lane.b32.xlu0 %v1108, 64
    %v1580 = vpop.permute.xlu0 %1579
    %v1583 = vsel %vm268, %v1421, 0
    %1585 = vmatpush.msra.mxu0 0.0
    %1586 = vmatpush.msra.mxu0 0.0
    %1587 = vmatpush.msra.mxu0 0.0
    %1588 = vmatpush.msra.mxu0 0.0
    %1589 = vmatpush.msra.mxu0 0.0
    %1590 = vmatpush.msra.mxu0 0.0
    %1591 = vmatpush.msra.mxu0 0.0
    %1592 = vmatpush.msra.mxu0 0.0
    %1593 = vmatpush.msra.mxu0 0.0
    %1594 = vmatpush.msra.mxu0 0.0
    %1595 = vmatpush.msra.mxu0 0.0
    %1596 = vmatpush.msra.mxu0 0.0
    %1597 = vmatpush.msra.mxu0 0.0
    %1598 = vmatpush.msra.mxu0 0.0
    %1599 = vmatpush.msra.mxu0 0.0
    %1600 = vmatpush.msra.mxu0 %v1580
    %1601 = vmatmul.f32.gmra.mxu0 %v1583
    %v1602 = vpop.f32.mrf.mxu0
    %v1603 = vadd.f32 0.0, %v1602
    %1604 = vdwg.mxu0
    %1605 = vrot.lane.b32.xlu0 %v1110, 64
    %v1606 = vpop.permute.xlu0 %1605
    %v1609 = vsel %vm268, %v1422, 0
    %1611 = vmatpush.msra.mxu0 0.0
    %1612 = vmatpush.msra.mxu0 0.0
    %1613 = vmatpush.msra.mxu0 0.0
    %1614 = vmatpush.msra.mxu0 0.0
    %1615 = vmatpush.msra.mxu0 0.0
    %1616 = vmatpush.msra.mxu0 0.0
    %1617 = vmatpush.msra.mxu0 0.0
    %1618 = vmatpush.msra.mxu0 0.0
    %1619 = vmatpush.msra.mxu0 0.0
    %1620 = vmatpush.msra.mxu0 0.0
    %1621 = vmatpush.msra.mxu0 0.0
    %1622 = vmatpush.msra.mxu0 0.0
    %1623 = vmatpush.msra.mxu0 0.0
    %1624 = vmatpush.msra.mxu0 0.0
    %1625 = vmatpush.msra.mxu0 0.0
    %1626 = vmatpush.msra.mxu0 %v1606
    %1627 = vmatmul.f32.gmra.mxu0 %v1609
    %v1628 = vpop.f32.mrf.mxu0
    %v1629 = vadd.f32 0.0, %v1628
    %1630 = vdwg.mxu0
    %1633 = vrot.lane.b32.xlu0 %v1499, 8
    %v1634 = vpop.permute.xlu0 %1633
    %1635 = vrot.lane.b32.xlu0 %v1525, 8
    %v1636 = vpop.permute.xlu0 %1635
    %1641 = vrot.lane.b32.xlu0 %v1551, 16
    %v1642 = vpop.permute.xlu0 %1641
    %1643 = vrot.lane.b32.xlu0 %v1577, 16
    %v1644 = vpop.permute.xlu0 %1643
    %1649 = vrot.lane.b32.xlu0 %v1603, 24
    %v1650 = vpop.permute.xlu0 %1649
    %1651 = vrot.lane.b32.xlu0 %v1629, 24
    %v1652 = vpop.permute.xlu0 %1651
    %v1655 = vsel %vm268, %v1447, %v1634
    %v1656 = vsel %vm268, %v1473, %v1636
    %v1657 = vsel %vm819, %v1655, %v1642
    %v1658 = vsel %vm819, %v1656, %v1644
    %v1659 = vsel %vm822, %v1657, %v1650
    %v1660 = vsel %vm822, %v1658, %v1652
    %v1661 = vld [vmem:[#allocation7 + $0xb] sm:$0x1]
    %v1662 = vperm.slane %v1661, 0
    %v1664 = vsel %vm127, %v1659, 0
    %v1667 = vsel %vm127, %v1660, 0
    %1669 = vmatpush.msra.mxu0 0.0
    %1670 = vmatpush.msra.mxu0 0.0
    %1671 = vmatpush.msra.mxu0 0.0
    %1672 = vmatpush.msra.mxu0 0.0
    %1673 = vmatpush.msra.mxu0 0.0
    %1674 = vmatpush.msra.mxu0 0.0
    %1675 = vmatpush.msra.mxu0 0.0
    %1676 = vmatpush.msra.mxu0 0.0
    %1677 = vmatpush.msra.mxu0 0.0
    %1678 = vmatpush.msra.mxu0 0.0
    %1679 = vmatpush.msra.mxu0 0.0
    %1680 = vmatpush.msra.mxu0 0.0
    %1681 = vmatpush.msra.mxu0 %v1049
    %1682 = vmatpush.msra.mxu0 %v1048
    %1683 = vmatpush.msra.mxu0 %v1047
    %1684 = vmatpush.msra.mxu0 %v1046
    %1685 = vmatmul.f32.gmra.mxu0 %v1664
    %v1686 = vpop.f32.mrf.mxu0
    %v1687 = vadd.f32 %v1662, %v1686
    %1688 = vmatmul.f32.gmra.mxu0 %v1667
    %v1689 = vpop.f32.mrf.mxu0
    %v1690 = vadd.f32 %v1662, %v1689
    %1691 = vdwg.mxu0
    %v1692 = vadd.f32 %v1036, %v1687
    %v1693 = vadd.f32 %v1037, %v1690
    %v1694 = vld [vmem:[#allocation7 + $0xc] sm:$0x1]
    %v1695 = vld [vmem:[#allocation7 + $0xd] sm:$0x1]
    %v1696 = vsel %vm127, %v1692, 0.0
    %1697 = vadd.xlane.f32.xlu0 %v1696
    %v1698 = vpop.xlane.xlu0 %1697
    %v1699 = vsel %vm127, %v1693, 0.0
    %1700 = vadd.xlane.f32.xlu0 %v1699
    %v1701 = vpop.xlane.xlu0 %1700
    %v1702 = vmul.f32 %v1698, %v140
    %v1703 = vmul.f32 %v1701, %v140
    %v1704 = vsub.f32 %v1692, %v1702
    %v1705 = vsub.f32 %v1693, %v1703
    %v1706 = vmul.f32 %v1704, %v1704
    %v1707 = vmul.f32 %v1705, %v1705
    %v1708 = vsel %vm127, %v1706, 0.0
    %1709 = vadd.xlane.f32.xlu0 %v1708
    %v1710 = vpop.xlane.xlu0 %1709
    %v1711 = vsel %vm127, %v1707, 0.0
    %1712 = vadd.xlane.f32.xlu0 %v1711
    %v1713 = vpop.xlane.xlu0 %1712
    %v1714 = vmul.f32 %v1710, %v140
    %v1715 = vmul.f32 %v1713, %v140
    %v1716 = vadd.f32 %v1714, 1e-12
    %v1717 = vadd.f32 %v1715, 1e-12
    %v1718 = vrsqrt.pop %v1716
    %v1719 = vmul.f32 %v1718, %v1716
    %v1720 = vmul.f32 %v1719, %v1718
    %v1721 = vmul.f32 0.5, %v1720
    %v1722 = vsub.f32 1.5, %v1721
    %v1723 = vmul.f32 %v1718, %v1722
    %vm1724 = vweird.f32 %v1716
    %vm1725 = vweird.f32 %v1718
    %vm1726 = vmor %vm1724, %vm1725
    %v1727 = vsel %vm1726, %v1718, %v1723
    %v1728 = vrsqrt.pop %v1717
    %v1729 = vmul.f32 %v1728, %v1717
    %v1730 = vmul.f32 %v1729, %v1728
    %v1731 = vmul.f32 0.5, %v1730
    %v1732 = vsub.f32 1.5, %v1731
    %v1733 = vmul.f32 %v1728, %v1732
    %vm1734 = vweird.f32 %v1717
    %vm1735 = vweird.f32 %v1728
    %vm1736 = vmor %vm1734, %vm1735
    %v1737 = vsel %vm1736, %v1728, %v1733
    %v1738 = vmul.f32 %v1704, %v1727
    %v1739 = vmul.f32 %v1705, %v1737
    %v1740 = vperm.slane %v1694, 0
    %v1741 = vmul.f32 %v1738, %v1740
    %v1742 = vmul.f32 %v1739, %v1740
    %v1743 = vperm.slane %v1695, 0
    %v1744 = vadd.f32 %v1741, %v1743
    %v1745 = vadd.f32 %v1742, %v1743
    %v1746 = vld [vmem:[#allocation7 + $0xe] sm:$0x1]
    %v1747 = vperm.slane %v1746, 0
    %v1749 = vsel %vm127, %v1744, 0
    %v1752 = vsel %vm127, %v1745, 0
    %1754 = vmatpush.msra.mxu0 0.0
    %1755 = vmatpush.msra.mxu0 0.0
    %1756 = vmatpush.msra.mxu0 0.0
    %1757 = vmatpush.msra.mxu0 0.0
    %1758 = vmatpush.msra.mxu0 0.0
    %1759 = vmatpush.msra.mxu0 0.0
    %1760 = vmatpush.msra.mxu0 0.0
    %1761 = vmatpush.msra.mxu0 0.0
    %1762 = vmatpush.msra.mxu0 0.0
    %1763 = vmatpush.msra.mxu0 0.0
    %1764 = vmatpush.msra.mxu0 0.0
    %1765 = vmatpush.msra.mxu0 0.0
    %1766 = vmatpush.msra.mxu0 %v1045
    %1767 = vmatpush.msra.mxu0 %v1044
    %1768 = vmatpush.msra.mxu0 %v1043
    %1769 = vmatpush.msra.mxu0 %v1042
    %1770 = vmatmul.f32.gmra.mxu0 %v1749
    %v1771 = vpop.f32.mrf.mxu0
    %v1772 = vadd.f32 %v1747, %v1771
    %1773 = vmatmul.f32.gmra.mxu0 %v1752
    %v1774 = vpop.f32.mrf.mxu0
    %v1775 = vadd.f32 %v1747, %v1774
    %1776 = vdwg.mxu0
    %v1777 = vmul.f32 %v1772, %v1772
    %v1778 = vmul.f32 %v1775, %v1775
    %v1779 = vmul.f32 %v1772, %v1777
    %v1780 = vmul.f32 %v1775, %v1778
    %v1781 = vmul.f32 %v1779, 0.044715
    %v1782 = vmul.f32 %v1780, 0.044715
    %v1783 = vadd.f32 %v1772, %v1781
    %v1784 = vadd.f32 %v1775, %v1782
    %v1785 = vmul.f32 %v1783, 0.7978846
    %v1786 = vmul.f32 %v1784, 0.7978846
    %v1787 = vtanh.pop %v1785
    %v1788 = vtanh.pop %v1786
    %v1789 = vadd.f32 %v1787, 1.0
    %v1790 = vadd.f32 %v1788, 1.0
    %v1791 = vmul.f32 %v1789, 0.5
    %v1792 = vmul.f32 %v1790, 0.5
    %v1793 = vmul.f32 %v1772, %v1791
    %v1794 = vmul.f32 %v1775, %v1792
    %v1795 = vld [vmem:[#allocation7 + $0xf] sm:$0x1]
    %v1796 = vperm.slane %v1795, 0
    %1797 = vmatpush.msra.mxu0 %v1065
    %1798 = vmatpush.msra.mxu0 %v1064
    %1799 = vmatpush.msra.mxu0 %v1063
    %1800 = vmatpush.msra.mxu0 %v1062
    %1801 = vmatpush.msra.mxu0 %v1061
    %1802 = vmatpush.msra.mxu0 %v1060
    %1803 = vmatpush.msra.mxu0 %v1059
    %1804 = vmatpush.msra.mxu0 %v1058
    %1805 = vmatpush.msra.mxu0 %v1057
    %1806 = vmatpush.msra.mxu0 %v1056
    %1807 = vmatpush.msra.mxu0 %v1055
    %1808 = vmatpush.msra.mxu0 %v1054
    %1809 = vmatpush.msra.mxu0 %v1053
    %1810 = vmatpush.msra.mxu0 %v1052
    %1811 = vmatpush.msra.mxu0 %v1051
    %1812 = vmatpush.msra.mxu0 %v1050
    %1813 = vmatmul.f32.gmra.mxu0 %v1793
    %v1814 = vpop.f32.mrf.mxu0
    %v1815 = vadd.f32 %v1796, %v1814
    %1816 = vmatmul.f32.gmra.mxu0 %v1794
    %v1817 = vpop.f32.mrf.mxu0
    %v1818 = vadd.f32 %v1796, %v1817
    %1819 = vdwg.mxu0
    %v1820 = vadd.f32 %v1744, %v1815
    %v1821 = vadd.f32 %v1745, %v1818
    %v1822 = vld [vmem:[#allocation7 + $0x10] sm:$0x1]
    %v1823 = vld [vmem:[#allocation7 + $0x11] sm:$0x1]
    %v1824 = vsel %vm127, %v1820, 0.0
    %1825 = vadd.xlane.f32.xlu0 %v1824
    %v1826 = vpop.xlane.xlu0 %1825
    %v1827 = vsel %vm127, %v1821, 0.0
    %1828 = vadd.xlane.f32.xlu0 %v1827
    %v1829 = vpop.xlane.xlu0 %1828
    %v1830 = vmul.f32 %v1826, %v140
    %v1831 = vmul.f32 %v1829, %v140
    %v1832 = vsub.f32 %v1820, %v1830
    %v1833 = vsub.f32 %v1821, %v1831
    %v1834 = vmul.f32 %v1832, %v1832
    %v1835 = vmul.f32 %v1833, %v1833
    %v1836 = vsel %vm127, %v1834, 0.0
    %1837 = vadd.xlane.f32.xlu0 %v1836
    %v1838 = vpop.xlane.xlu0 %1837
    %v1839 = vsel %vm127, %v1835, 0.0
    %1840 = vadd.xlane.f32.xlu0 %v1839
    %v1841 = vpop.xlane.xlu0 %1840
    %v1842 = vmul.f32 %v1838, %v140
    %v1843 = vmul.f32 %v1841, %v140
    %v1844 = vadd.f32 %v1842, 1e-12
    %v1845 = vadd.f32 %v1843, 1e-12
    %v1846 = vrsqrt.pop %v1844
    %v1847 = vmul.f32 %v1846, %v1844
    %v1848 = vmul.f32 %v1847, %v1846
    %v1849 = vmul.f32 0.5, %v1848
    %v1850 = vsub.f32 1.5, %v1849
    %v1851 = vmul.f32 %v1846, %v1850
    %vm1852 = vweird.f32 %v1844
    %vm1853 = vweird.f32 %v1846
    %vm1854 = vmor %vm1852, %vm1853
    %v1855 = vsel %vm1854, %v1846, %v1851
    %v1856 = vrsqrt.pop %v1845
    %v1857 = vmul.f32 %v1856, %v1845
    %v1858 = vmul.f32 %v1857, %v1856
    %v1859 = vmul.f32 0.5, %v1858
    %v1860 = vsub.f32 1.5, %v1859
    %v1861 = vmul.f32 %v1856, %v1860
    %vm1862 = vweird.f32 %v1845
    %vm1863 = vweird.f32 %v1856
    %vm1864 = vmor %vm1862, %vm1863
    %v1865 = vsel %vm1864, %v1856, %v1861
    %v1866 = vmul.f32 %v1832, %v1855
    %v1867 = vmul.f32 %v1833, %v1865
    %v1868 = vperm.slane %v1822, 0
    %v1869 = vmul.f32 %v1866, %v1868
    %v1870 = vmul.f32 %v1867, %v1868
    %v1871 = vperm.slane %v1823, 0
    %v1872 = vadd.f32 %v1869, %v1871
    %v1873 = vadd.f32 %v1870, %v1871
    %v1874 = vld [vmem:[#allocation2 + $0x190] sm:$0xff]
    %v1875 = vld [vmem:[#allocation2 + $0x198] sm:$0xff]
    %v1876 = vld [vmem:[#allocation2 + $0x1a0] sm:$0xff]
    %v1877 = vld [vmem:[#allocation2 + $0x1a8] sm:$0xff]
    %v1878 = vld [vmem:[#allocation5 + $0x80] sm:$0xff]
    %v1879 = vld [vmem:[#allocation5 + $0x88] sm:$0xff]
    %v1880 = vld [vmem:[#allocation5 + $0x90] sm:$0xff]
    %v1881 = vld [vmem:[#allocation5 + $0x98] sm:$0xff]
    %v1882 = vld [vmem:[#allocation7 + $0x12] sm:$0x1]
    %v1883 = vperm.slane %v1882, 0
    %v1886 = vrot.slane %v1873, 7
    %vm1887 = vcmask 1041409
    %v1888 = vsel %vm1887, %v1886, %v1872
    %v1889 = vsel %vm127, %v1888, 0
    %1891 = vmatpush.msra.mxu0 0.0
    %1892 = vmatpush.msra.mxu0 0.0
    %1893 = vmatpush.msra.mxu0 0.0
    %1894 = vmatpush.msra.mxu0 0.0
    %1895 = vmatpush.msra.mxu0 0.0
    %1896 = vmatpush.msra.mxu0 0.0
    %1897 = vmatpush.msra.mxu0 0.0
    %1898 = vmatpush.msra.mxu0 0.0
    %1899 = vmatpush.msra.mxu0 0.0
    %1900 = vmatpush.msra.mxu0 0.0
    %1901 = vmatpush.msra.mxu0 0.0
    %1902 = vmatpush.msra.mxu0 0.0
    %1903 = vmatpush.msra.mxu0 %v1877
    %1904 = vmatpush.msra.mxu0 %v1876
    %1905 = vmatpush.msra.mxu0 %v1875
    %1906 = vmatpush.msra.mxu0 %v1874
    %1907 = vmatmul.f32.gmra.mxu0 %v1889
    %v1908 = vpop.f32.mrf.mxu0
    %v1909 = vadd.f32 %v1883, %v1908
    %1910 = vdwg.mxu0
    %v1911 = vtanh.pop %v1909
    %v1912 = vld [vmem:[#allocation7 + $0x13] sm:$0x1]
    %v1913 = vld [vmem:[#allocation7 + $0x14] sm:$0x1]
    %vm1914 = vcmask 254976
    %v1915 = vsel %vm1914, %v1911, 0.0
    %1916 = vadd.xlane.f32.xlu0 %v1915
    %v1917 = vpop.xlane.xlu0 %1916
    %v1918 = vmul.f32 %v1917, %v140
    %v1919 = vsub.f32 %v1911, %v1918
    %v1920 = vmul.f32 %v1919, %v1919
    %v1921 = vsel %vm1914, %v1920, 0.0
    %1922 = vadd.xlane.f32.xlu0 %v1921
    %v1923 = vpop.xlane.xlu0 %1922
    %v1924 = vmul.f32 %v1923, %v140
    %v1925 = vadd.f32 %v1924, 1e-05
    %v1926 = vrsqrt.pop %v1925
    %v1927 = vmul.f32 %v1926, %v1925
    %v1928 = vmul.f32 %v1927, %v1926
    %v1929 = vmul.f32 0.5, %v1928
    %v1930 = vsub.f32 1.5, %v1929
    %v1931 = vmul.f32 %v1926, %v1930
    %vm1932 = vweird.f32 %v1925
    %vm1933 = vweird.f32 %v1926
    %vm1934 = vmor %vm1932, %vm1933
    %v1935 = vsel %vm1934, %v1926, %v1931
    %v1936 = vmul.f32 %v1919, %v1935
    %v1937 = vperm.slane %v1912, 0
    %v1938 = vmul.f32 %v1936, %v1937
    %v1939 = vperm.slane %v1913, 0
    %v1940 = vadd.f32 %v1938, %v1939
    %v1941 = vld [vmem:[#allocation7 + $0x15] sm:$0x1]
    %v1942 = vperm.slane %v1941, 0
    %v1944 = vsel %vm127, %v1940, 0
    %1946 = vmatpush.msra.mxu0 0.0
    %1947 = vmatpush.msra.mxu0 0.0
    %1948 = vmatpush.msra.mxu0 0.0
    %1949 = vmatpush.msra.mxu0 0.0
    %1950 = vmatpush.msra.mxu0 0.0
    %1951 = vmatpush.msra.mxu0 0.0
    %1952 = vmatpush.msra.mxu0 0.0
    %1953 = vmatpush.msra.mxu0 0.0
    %1954 = vmatpush.msra.mxu0 0.0
    %1955 = vmatpush.msra.mxu0 0.0
    %1956 = vmatpush.msra.mxu0 0.0
    %1957 = vmatpush.msra.mxu0 0.0
    %1958 = vmatpush.msra.mxu0 %v1881
    %1959 = vmatpush.msra.mxu0 %v1880
    %1960 = vmatpush.msra.mxu0 %v1879
    %1961 = vmatpush.msra.mxu0 %v1878
    %1962 = vmatmul.f32.gmra.mxu0 %v1944
    %v1963 = vpop.f32.mrf.mxu0
    %v1964 = vadd.f32 %v1942, %v1963
    %1965 = vdwg.mxu0
    %1966 = vst [vmem:[#allocation8] sm:$0x3] %v1964
    // Predicated region
    $region34: #{dpr_forward.1} parent=1 // pred_check
      _
    $region35: #{dpr_forward.1} parent=1 // pred_check_branch
      %1968 = sbr.rel (0) target = $region37
    $region36: #{dpr_forward.1} parent=1 // pred_region
      %1970 = vsyncadd [#allocation4], 0
      %s1972 = sshll.u32 [#allocation8], 4
      %s1973 = int_to_ptr.vmem [resolvable:$true] %s1972
      %s1974 = sshll.u32 %s5, 4
      %s1975 = int_to_ptr.hbm [resolvable:$true] %s1974
      %1977 = dma.vmem_to_hbm [thread:$0]  %s1973, 32, %s1975, [#allocation4]
    $region37: #{dpr_forward.1} parent=1 // pred_fallthru
      _
    // Predicated region
    $region38: #{dpr_forward.1} parent=1 // pred_check
      _
    $region39: #{dpr_forward.1} parent=1 // pred_check_branch
      %1979 = sbr.rel (0) target = $region41
    $region40: #{dpr_forward.1} parent=1 // pred_region
      %1981 = dma.done [#allocation4], 32
    $region41: #{dpr_forward.1} parent=1 // pred_fallthru
      _
    %1982 = vsyncpa [#allocation3], 1
    %1983 = vsyncpa [#allocation6], 1
    %1984 = vsyncpa [#allocation4], 1

</llo_original>
